<compile_context>
chip_gen: v7x
topology: tpu7x:2x2x1
jax: 0.10.0
libtpu: 0.0.40
codegen_flags: <defaults>
</compile_context>

<pallas_src>
import functools

import jax
import jax.numpy as jnp
from jax import lax
from jax.experimental import pallas as pl
from jax.experimental.pallas import tpu as pltpu

EPS = 1e-5  # PyTorch GroupNorm default eps
_TAPS = tuple((dh, dw) for dh in (-1, 0, 1) for dw in (-1, 0, 1))  # row-major


def _resblock_kernel(x_ref, w1_ref, w2_ref, gavg_ref, masks_ref,
                     o_ref, slab_ref, *, width, nb):
    C, HW = x_ref.shape[1], x_ref.shape[2]

    gavg = gavg_ref[...]                      # (C, C) group-averaging matrix
    masks = masks_ref[...]                    # (8, HW) packed boundary masks
    # Hoist the (1, HW) -> (C, HW) broadcasts once for the whole kernel.
    mask_b = [jnp.broadcast_to(masks[k:k + 1, :], (C, HW)) for k in range(8)]

    def gn_relu(h):
        # Single-pass GroupNorm stats: s1 and s2 both come straight from h,
        # so the two lane reductions and the two tiny dots are independent
        # (no reduce -> matmul -> subtract -> reduce round trip).
        s1 = jnp.sum(h, axis=1, keepdims=True)                 # (C, 1)
        s2 = jnp.sum(h * h, axis=1, keepdims=True)             # (C, 1)
        mean = jnp.dot(gavg, s1, preferred_element_type=jnp.float32)
        ex2 = jnp.dot(gavg, s2, preferred_element_type=jnp.float32)
        var = ex2 - mean * mean                                # biased var
        return jnp.maximum((h - mean) * lax.rsqrt(var + EPS), 0.0)

    def fill_slab(h, img):
        # Write the 9 shifted+masked taps of one image straight into the
        # persistent im2col slab: rows [k*C, (k+1)*C), cols [img*HW, ...).
        col = img * HW
        mi = 0
        for k, (dh, dw) in enumerate(_TAPS):
            if dh == 0 and dw == 0:
                v = h
            else:
                # result[p] = h[p + dh*W + dw]  (wrapped taps zeroed by mask)
                shift = (-(dh * width + dw)) % HW
                v = pltpu.roll(h, shift=shift, axis=1) * mask_b[mi]
                mi += 1
            slab_ref[k * C:(k + 1) * C, col:col + HW] = v

    xs = [x_ref[i].astype(jnp.float32) for i in range(nb)]

    # --- gn1 -> relu -> conv1: one K=9C GEMM over all nb images ---
    for i in range(nb):
        fill_slab(gn_relu(xs[i]), i)
    h1 = jnp.dot(w1_ref[...], slab_ref[...],
                 preferred_element_type=jnp.float32)           # (C, nb*HW)

    # --- gn2 -> relu -> conv2: slab scratch reused ---
    for i in range(nb):
        fill_slab(gn_relu(h1[:, i * HW:(i + 1) * HW]), i)
    h2 = jnp.dot(w2_ref[...], slab_ref[...],
                 preferred_element_type=jnp.float32)           # (C, nb*HW)

    # --- residual add + lane-dense store ---
    for i in range(nb):
        o_ref[i] = (h2[:, i * HW:(i + 1) * HW] + xs[i]).astype(o_ref.dtype)


def _images_per_step(n):
    """Collapse the batch into one grid step on single-TensorCore chips
    (v5e / v6e); keep a parallel per-image grid elsewhere (v7x: 2 TCs)."""
    try:
        kind = jax.devices()[0].device_kind.lower()
    except Exception:
        return 1
    single_tc = any(t in kind for t in
                    ("v5 lite", "v5litepod", "v5e", "v6 lite", "v6e"))
    return n if single_tc else 1


def resblock_forward(x_nchw, w1, w2, *, num_groups=8):
    """x_nchw: (N, C, H, W) float32; w1, w2: (3, 3, C, C) HWIO, bias-free."""
    N, C, H, W = x_nchw.shape
    G = num_groups
    assert C % G == 0, "in_channels must be divisible by num_groups"
    HW = H * W
    cpg = C // G

    nb = _images_per_step(N)
    if N % nb:
        nb = 1
    grid = (N // nb,)

    # NCHW -> (N, C, H*W): pure reshape, flattened spatial axis is lane-dense.
    x2 = x_nchw.reshape(N, C, HW)

    # HWIO (3,3,Cin,Cout) -> (Cout, 9*Cin); column (kh*3+kw)*Cin + ci matches
    # the slab's tap-major row layout.
    w1_2d = jnp.transpose(w1, (3, 0, 1, 2)).reshape(C, 9 * C).astype(jnp.float32)
    w2_2d = jnp.transpose(w2, (3, 0, 1, 2)).reshape(C, 9 * C).astype(jnp.float32)

    # (gavg @ per_channel_sums)[c] = mean over channel c's group (block-diag / n).
    gid = jnp.arange(C) // cpg
    gavg = (gid[:, None] == gid[None, :]).astype(jnp.float32) / (cpg * HW)

    # Packed boundary-validity masks for the 8 non-center taps (TAPS order).
    r_idx = jnp.arange(HW) // W
    c_idx = jnp.arange(HW) % W
    ones = jnp.ones((HW,), jnp.bool_)
    rows = []
    for dh, dw in _TAPS:
        if dh == 0 and dw == 0:
            continue
        row_ok = ones if dh == 0 else (r_idx >= 1 if dh < 0 else r_idx <= H - 2)
        col_ok = ones if dw == 0 else (c_idx >= 1 if dw < 0 else c_idx <= W - 2)
        rows.append(jnp.logical_and(row_ok, col_ok))
    masks = jnp.stack(rows).astype(jnp.float32)                # (8, HW)

    kernel = functools.partial(_resblock_kernel, width=W, nb=nb)

    conv_flops = 2 * 2 * HW * (9 * C) * C                      # two 3x3 convs
    cost = pl.CostEstimate(
        flops=N * (conv_flops + 10 * C * HW),
        transcendentals=N * 2 * C,
        bytes_accessed=(2 * N * C * HW + 2 * C * 9 * C + C * C + 8 * HW) * 4,
    )

    out = pl.pallas_call(
        kernel,
        out_shape=jax.ShapeDtypeStruct((N, C, HW), x_nchw.dtype),
        grid_spec=pltpu.PrefetchScalarGridSpec(
            num_scalar_prefetch=0,
            grid=grid,
            in_specs=[
                pl.BlockSpec((nb, C, HW), lambda n: (n, 0, 0)),
                pl.BlockSpec((C, 9 * C), lambda n: (0, 0)),
                pl.BlockSpec((C, 9 * C), lambda n: (0, 0)),
                pl.BlockSpec((C, C), lambda n: (0, 0)),
                pl.BlockSpec((8, HW), lambda n: (0, 0)),
            ],
            out_specs=pl.BlockSpec((nb, C, HW), lambda n: (n, 0, 0)),
            scratch_shapes=[pltpu.VMEM((9 * C, nb * HW), jnp.float32)],
        ),
        compiler_params=pltpu.CompilerParams(
            dimension_semantics=("parallel",)),
        cost_estimate=cost,
    )(x2, w1_2d, w2_2d, gavg, masks)
    return out.reshape(N, C, H, W)


def _reference_forward(x, w1, w2, num_groups=8):
    """Pure-JAX reference matching the PyTorch ResBlock forward."""
    def gn(h):
        n, c, hh, ww = h.shape
        hg = h.reshape(n, num_groups, (c // num_groups) * hh * ww)
        m = hg.mean(-1, keepdims=True)
        v = hg.var(-1, keepdims=True)
        return ((hg - m) / jnp.sqrt(v + EPS)).reshape(n, c, hh, ww)

    def conv(h, w):
        return lax.conv_general_dilated(
            h, w, window_strides=(1, 1), padding="SAME",
            dimension_numbers=("NCHW", "HWIO", "NCHW"),
            precision=lax.Precision.HIGHEST)

    identity = x
    h = jax.nn.relu(gn(x))
    h = conv(h, w1)
    h = jax.nn.relu(gn(h))
    h = conv(h, w2)
    return h + identity


if __name__ == "__main__":
    N, C, H, W = 2, 16, 16, 16     # C must be divisible by num_groups=8
    NUM_GROUPS = 8

    key = jax.random.PRNGKey(0)
    kx, k1, k2 = jax.random.split(key, 3)
    x = jax.random.normal(kx, (N, C, H, W), dtype=jnp.float32)
    # Deterministic synthetic conv weights (HWIO); bias=False per module spec.
    w1 = jax.random.normal(k1, (3, 3, C, C), dtype=jnp.float32) * 0.1
    w2 = jax.random.normal(k2, (3, 3, C, C), dtype=jnp.float32) * 0.1

    y = resblock_forward(x, w1, w2, num_groups=NUM_GROUPS)
    y = jax.block_until_ready(y)

    y_ref = _reference_forward(x, w1, w2, num_groups=NUM_GROUPS)
    assert y.shape == (N, C, H, W)
    # Tolerance accommodates MXU multi-pass f32 rounding differences.
    assert jnp.allclose(y, y_ref, rtol=2e-2, atol=2e-2), (
        f"mismatch vs JAX reference, max abs diff {jnp.max(jnp.abs(y - y_ref))}")

    print("KERNEL_OK")
</pallas_src>

<mosaic_0001>
module attributes {stable_mosaic.version = 11 : i64} {
  func.func @_resblock_kernel(%arg0: i32, %arg1: memref<1x16x256xf32, #tpu.memory_space<vmem>>, %arg2: memref<16x144xf32, #tpu.memory_space<vmem>>, %arg3: memref<16x144xf32, #tpu.memory_space<vmem>>, %arg4: memref<16x16xf32, #tpu.memory_space<vmem>>, %arg5: memref<8x256xf32, #tpu.memory_space<vmem>>, %arg6: memref<1x16x256xf32, #tpu.memory_space<vmem>>, %arg7: memref<144x256xf32, #tpu.memory_space<vmem>>) attributes {dimension_semantics = [#tpu.dimension_semantics<parallel>], iteration_bounds = array<i64: 2>, scalar_prefetch = 0 : i64, scratch_operands = 1 : i64, tpu.core_type = #tpu.core_type<tc>, window_params = [{transform_indices = @transform_0, window_bounds = array<i64: 1, 16, 256>}, {pipeline_mode = #tpu.pipeline_mode<synchronous>, transform_indices = @transform_1, window_bounds = array<i64: 16, 144>}, {pipeline_mode = #tpu.pipeline_mode<synchronous>, transform_indices = @transform_2, window_bounds = array<i64: 16, 144>}, {pipeline_mode = #tpu.pipeline_mode<synchronous>, transform_indices = @transform_3, window_bounds = array<i64: 16, 16>}, {pipeline_mode = #tpu.pipeline_mode<synchronous>, transform_indices = @transform_4, window_bounds = array<i64: 8, 256>}, {transform_indices = @transform_5, window_bounds = array<i64: 1, 16, 256>}]} {
    %c0 = arith.constant 0 : index
    %c0_0 = arith.constant 0 : index
    %0 = vector.load %arg4[%c0, %c0_0] : memref<16x16xf32, #tpu.memory_space<vmem>>, vector<16x16xf32>
    %c0_1 = arith.constant 0 : index
    %c0_2 = arith.constant 0 : index
    %1 = vector.load %arg5[%c0_1, %c0_2] : memref<8x256xf32, #tpu.memory_space<vmem>>, vector<8x256xf32>
    %2 = vector.extract_strided_slice %1 {offsets = [0, 0], sizes = [1, 256], strides = [1, 1]} : vector<8x256xf32> to vector<1x256xf32>
    %3 = vector.shape_cast %2 : vector<1x256xf32> to vector<1x256xf32>
    %4 = vector.broadcast %3 : vector<1x256xf32> to vector<16x256xf32>
    %5 = vector.extract_strided_slice %1 {offsets = [1, 0], sizes = [1, 256], strides = [1, 1]} : vector<8x256xf32> to vector<1x256xf32>
    %6 = vector.shape_cast %5 : vector<1x256xf32> to vector<1x256xf32>
    %7 = vector.broadcast %6 : vector<1x256xf32> to vector<16x256xf32>
    %8 = vector.extract_strided_slice %1 {offsets = [2, 0], sizes = [1, 256], strides = [1, 1]} : vector<8x256xf32> to vector<1x256xf32>
    %9 = vector.shape_cast %8 : vector<1x256xf32> to vector<1x256xf32>
    %10 = vector.broadcast %9 : vector<1x256xf32> to vector<16x256xf32>
    %11 = vector.extract_strided_slice %1 {offsets = [3, 0], sizes = [1, 256], strides = [1, 1]} : vector<8x256xf32> to vector<1x256xf32>
    %12 = vector.shape_cast %11 : vector<1x256xf32> to vector<1x256xf32>
    %13 = vector.broadcast %12 : vector<1x256xf32> to vector<16x256xf32>
    %14 = vector.extract_strided_slice %1 {offsets = [4, 0], sizes = [1, 256], strides = [1, 1]} : vector<8x256xf32> to vector<1x256xf32>
    %15 = vector.shape_cast %14 : vector<1x256xf32> to vector<1x256xf32>
    %16 = vector.broadcast %15 : vector<1x256xf32> to vector<16x256xf32>
    %17 = vector.extract_strided_slice %1 {offsets = [5, 0], sizes = [1, 256], strides = [1, 1]} : vector<8x256xf32> to vector<1x256xf32>
    %18 = vector.shape_cast %17 : vector<1x256xf32> to vector<1x256xf32>
    %19 = vector.broadcast %18 : vector<1x256xf32> to vector<16x256xf32>
    %20 = vector.extract_strided_slice %1 {offsets = [6, 0], sizes = [1, 256], strides = [1, 1]} : vector<8x256xf32> to vector<1x256xf32>
    %21 = vector.shape_cast %20 : vector<1x256xf32> to vector<1x256xf32>
    %22 = vector.broadcast %21 : vector<1x256xf32> to vector<16x256xf32>
    %23 = vector.extract_strided_slice %1 {offsets = [7, 0], sizes = [1, 256], strides = [1, 1]} : vector<8x256xf32> to vector<1x256xf32>
    %24 = vector.shape_cast %23 : vector<1x256xf32> to vector<1x256xf32>
    %25 = vector.broadcast %24 : vector<1x256xf32> to vector<16x256xf32>
    %c0_3 = arith.constant 0 : index
    %c0_4 = arith.constant 0 : index
    %c0_5 = arith.constant 0 : index
    %26 = vector.load %arg1[%c0_3, %c0_4, %c0_5] : memref<1x16x256xf32, #tpu.memory_space<vmem>>, vector<1x16x256xf32>
    %27 = vector.shape_cast %26 : vector<1x16x256xf32> to vector<16x256xf32>
    %cst = arith.constant dense<0.000000e+00> : vector<16xf32>
    %28 = vector.multi_reduction <add>, %27, %cst [1] : vector<16x256xf32> to vector<16xf32>
    %29 = vector.shape_cast %28 : vector<16xf32> to vector<16x1xf32>
    %30 = arith.mulf %27, %27 : vector<16x256xf32>
    %cst_6 = arith.constant dense<0.000000e+00> : vector<16xf32>
    %31 = vector.multi_reduction <add>, %30, %cst_6 [1] : vector<16x256xf32> to vector<16xf32>
    %32 = vector.shape_cast %31 : vector<16xf32> to vector<16x1xf32>
    %cst_7 = arith.constant dense<0.000000e+00> : vector<16x1xf32>
    %33 = tpu.matmul %0, %29, %cst_7 {dimension_numbers = #tpu.dot_dimension_numbers<[1], [0], [0], [1], [0, 0, 1, 1], [], []>} : vector<16x16xf32>, vector<16x1xf32>, vector<16x1xf32> -> vector<16x1xf32>
    %cst_8 = arith.constant dense<0.000000e+00> : vector<16x1xf32>
    %34 = tpu.matmul %0, %32, %cst_8 {dimension_numbers = #tpu.dot_dimension_numbers<[1], [0], [0], [1], [0, 0, 1, 1], [], []>} : vector<16x16xf32>, vector<16x1xf32>, vector<16x1xf32> -> vector<16x1xf32>
    %35 = arith.mulf %33, %33 : vector<16x1xf32>
    %36 = arith.subf %34, %35 : vector<16x1xf32>
    %37 = vector.broadcast %33 : vector<16x1xf32> to vector<16x256xf32>
    %38 = arith.subf %27, %37 : vector<16x256xf32>
    %cst_9 = arith.constant 9.99999974E-6 : f32
    %39 = vector.broadcast %cst_9 : f32 to vector<16x1xf32>
    %40 = arith.addf %36, %39 : vector<16x1xf32>
    %41 = math.rsqrt %40 : vector<16x1xf32>
    %42 = vector.broadcast %41 : vector<16x1xf32> to vector<16x256xf32>
    %43 = arith.mulf %38, %42 : vector<16x256xf32>
    %cst_10 = arith.constant 0.000000e+00 : f32
    %44 = vector.broadcast %cst_10 : f32 to vector<16x256xf32>
    %45 = arith.maximumf %43, %44 : vector<16x256xf32>
    %c17_i32 = arith.constant 17 : i32
    %46 = tpu.dynamic_rotate %45 by %c17_i32 dim 1 : vector<16x256xf32>, i32 -> vector<16x256xf32>
    %47 = arith.mulf %46, %4 : vector<16x256xf32>
    %c0_11 = arith.constant 0 : index
    %c0_12 = arith.constant 0 : index
    %48 = vector.load %arg7[%c0_11, %c0_12] : memref<144x256xf32, #tpu.memory_space<vmem>>, vector<16x256xf32>
    tpu.vector_store %arg7[%c0_11, %c0_12], %47 {strides = array<i32>} : memref<144x256xf32, #tpu.memory_space<vmem>>, vector<16x256xf32>,
    %c16_i32 = arith.constant 16 : i32
    %49 = tpu.dynamic_rotate %45 by %c16_i32 dim 1 : vector<16x256xf32>, i32 -> vector<16x256xf32>
    %50 = arith.mulf %49, %7 : vector<16x256xf32>
    %c16 = arith.constant 16 : index
    %c0_13 = arith.constant 0 : index
    %51 = vector.load %arg7[%c16, %c0_13] : memref<144x256xf32, #tpu.memory_space<vmem>>, vector<16x256xf32>
    tpu.vector_store %arg7[%c16, %c0_13], %50 {strides = array<i32>} : memref<144x256xf32, #tpu.memory_space<vmem>>, vector<16x256xf32>,
    %c15_i32 = arith.constant 15 : i32
    %52 = tpu.dynamic_rotate %45 by %c15_i32 dim 1 : vector<16x256xf32>, i32 -> vector<16x256xf32>
    %53 = arith.mulf %52, %10 : vector<16x256xf32>
    %c32 = arith.constant 32 : index
    %c0_14 = arith.constant 0 : index
    %54 = vector.load %arg7[%c32, %c0_14] : memref<144x256xf32, #tpu.memory_space<vmem>>, vector<16x256xf32>
    tpu.vector_store %arg7[%c32, %c0_14], %53 {strides = array<i32>} : memref<144x256xf32, #tpu.memory_space<vmem>>, vector<16x256xf32>,
    %c1_i32 = arith.constant 1 : i32
    %55 = tpu.dynamic_rotate %45 by %c1_i32 dim 1 : vector<16x256xf32>, i32 -> vector<16x256xf32>
    %56 = arith.mulf %55, %13 : vector<16x256xf32>
    %c48 = arith.constant 48 : index
    %c0_15 = arith.constant 0 : index
    %57 = vector.load %arg7[%c48, %c0_15] : memref<144x256xf32, #tpu.memory_space<vmem>>, vector<16x256xf32>
    tpu.vector_store %arg7[%c48, %c0_15], %56 {strides = array<i32>} : memref<144x256xf32, #tpu.memory_space<vmem>>, vector<16x256xf32>,
    %c64 = arith.constant 64 : index
    %c0_16 = arith.constant 0 : index
    %58 = vector.load %arg7[%c64, %c0_16] : memref<144x256xf32, #tpu.memory_space<vmem>>, vector<16x256xf32>
    tpu.vector_store %arg7[%c64, %c0_16], %45 {strides = array<i32>} : memref<144x256xf32, #tpu.memory_space<vmem>>, vector<16x256xf32>,
    %c255_i32 = arith.constant 255 : i32
    %59 = tpu.dynamic_rotate %45 by %c255_i32 dim 1 : vector<16x256xf32>, i32 -> vector<16x256xf32>
    %60 = arith.mulf %59, %16 : vector<16x256xf32>
    %c80 = arith.constant 80 : index
    %c0_17 = arith.constant 0 : index
    %61 = vector.load %arg7[%c80, %c0_17] : memref<144x256xf32, #tpu.memory_space<vmem>>, vector<16x256xf32>
    tpu.vector_store %arg7[%c80, %c0_17], %60 {strides = array<i32>} : memref<144x256xf32, #tpu.memory_space<vmem>>, vector<16x256xf32>,
    %c241_i32 = arith.constant 241 : i32
    %62 = tpu.dynamic_rotate %45 by %c241_i32 dim 1 : vector<16x256xf32>, i32 -> vector<16x256xf32>
    %63 = arith.mulf %62, %19 : vector<16x256xf32>
    %c96 = arith.constant 96 : index
    %c0_18 = arith.constant 0 : index
    %64 = vector.load %arg7[%c96, %c0_18] : memref<144x256xf32, #tpu.memory_space<vmem>>, vector<16x256xf32>
    tpu.vector_store %arg7[%c96, %c0_18], %63 {strides = array<i32>} : memref<144x256xf32, #tpu.memory_space<vmem>>, vector<16x256xf32>,
    %c240_i32 = arith.constant 240 : i32
    %65 = tpu.dynamic_rotate %45 by %c240_i32 dim 1 : vector<16x256xf32>, i32 -> vector<16x256xf32>
    %66 = arith.mulf %65, %22 : vector<16x256xf32>
    %c112 = arith.constant 112 : index
    %c0_19 = arith.constant 0 : index
    %67 = vector.load %arg7[%c112, %c0_19] : memref<144x256xf32, #tpu.memory_space<vmem>>, vector<16x256xf32>
    tpu.vector_store %arg7[%c112, %c0_19], %66 {strides = array<i32>} : memref<144x256xf32, #tpu.memory_space<vmem>>, vector<16x256xf32>,
    %c239_i32 = arith.constant 239 : i32
    %68 = tpu.dynamic_rotate %45 by %c239_i32 dim 1 : vector<16x256xf32>, i32 -> vector<16x256xf32>
    %69 = arith.mulf %68, %25 : vector<16x256xf32>
    %c128 = arith.constant 128 : index
    %c0_20 = arith.constant 0 : index
    %70 = vector.load %arg7[%c128, %c0_20] : memref<144x256xf32, #tpu.memory_space<vmem>>, vector<16x256xf32>
    tpu.vector_store %arg7[%c128, %c0_20], %69 {strides = array<i32>} : memref<144x256xf32, #tpu.memory_space<vmem>>, vector<16x256xf32>,
    %c0_21 = arith.constant 0 : index
    %c0_22 = arith.constant 0 : index
    %71 = vector.load %arg2[%c0_21, %c0_22] : memref<16x144xf32, #tpu.memory_space<vmem>>, vector<16x144xf32>
    %c0_23 = arith.constant 0 : index
    %c0_24 = arith.constant 0 : index
    %72 = vector.load %arg7[%c0_23, %c0_24] : memref<144x256xf32, #tpu.memory_space<vmem>>, vector<144x256xf32>
    %cst_25 = arith.constant dense<0.000000e+00> : vector<16x256xf32>
    %73 = tpu.matmul %71, %72, %cst_25 {dimension_numbers = #tpu.dot_dimension_numbers<[1], [0], [0], [1], [0, 0, 1, 1], [], []>} : vector<16x144xf32>, vector<144x256xf32>, vector<16x256xf32> -> vector<16x256xf32>
    %cst_26 = arith.constant dense<0.000000e+00> : vector<16xf32>
    %74 = vector.multi_reduction <add>, %73, %cst_26 [1] : vector<16x256xf32> to vector<16xf32>
    %75 = vector.shape_cast %74 : vector<16xf32> to vector<16x1xf32>
    %76 = arith.mulf %73, %73 : vector<16x256xf32>
    %cst_27 = arith.constant dense<0.000000e+00> : vector<16xf32>
    %77 = vector.multi_reduction <add>, %76, %cst_27 [1] : vector<16x256xf32> to vector<16xf32>
    %78 = vector.shape_cast %77 : vector<16xf32> to vector<16x1xf32>
    %cst_28 = arith.constant dense<0.000000e+00> : vector<16x1xf32>
    %79 = tpu.matmul %0, %75, %cst_28 {dimension_numbers = #tpu.dot_dimension_numbers<[1], [0], [0], [1], [0, 0, 1, 1], [], []>} : vector<16x16xf32>, vector<16x1xf32>, vector<16x1xf32> -> vector<16x1xf32>
    %cst_29 = arith.constant dense<0.000000e+00> : vector<16x1xf32>
    %80 = tpu.matmul %0, %78, %cst_29 {dimension_numbers = #tpu.dot_dimension_numbers<[1], [0], [0], [1], [0, 0, 1, 1], [], []>} : vector<16x16xf32>, vector<16x1xf32>, vector<16x1xf32> -> vector<16x1xf32>
    %81 = arith.mulf %79, %79 : vector<16x1xf32>
    %82 = arith.subf %80, %81 : vector<16x1xf32>
    %83 = vector.broadcast %79 : vector<16x1xf32> to vector<16x256xf32>
    %84 = arith.subf %73, %83 : vector<16x256xf32>
    %cst_30 = arith.constant 9.99999974E-6 : f32
    %85 = vector.broadcast %cst_30 : f32 to vector<16x1xf32>
    %86 = arith.addf %82, %85 : vector<16x1xf32>
    %87 = math.rsqrt %86 : vector<16x1xf32>
    %88 = vector.broadcast %87 : vector<16x1xf32> to vector<16x256xf32>
    %89 = arith.mulf %84, %88 : vector<16x256xf32>
    %cst_31 = arith.constant 0.000000e+00 : f32
    %90 = vector.broadcast %cst_31 : f32 to vector<16x256xf32>
    %91 = arith.maximumf %89, %90 : vector<16x256xf32>
    %c17_i32_32 = arith.constant 17 : i32
    %92 = tpu.dynamic_rotate %91 by %c17_i32_32 dim 1 : vector<16x256xf32>, i32 -> vector<16x256xf32>
    %93 = arith.mulf %92, %4 : vector<16x256xf32>
    %c0_33 = arith.constant 0 : index
    %c0_34 = arith.constant 0 : index
    %94 = vector.load %arg7[%c0_33, %c0_34] : memref<144x256xf32, #tpu.memory_space<vmem>>, vector<16x256xf32>
    tpu.vector_store %arg7[%c0_33, %c0_34], %93 {strides = array<i32>} : memref<144x256xf32, #tpu.memory_space<vmem>>, vector<16x256xf32>,
    %c16_i32_35 = arith.constant 16 : i32
    %95 = tpu.dynamic_rotate %91 by %c16_i32_35 dim 1 : vector<16x256xf32>, i32 -> vector<16x256xf32>
    %96 = arith.mulf %95, %7 : vector<16x256xf32>
    %c16_36 = arith.constant 16 : index
    %c0_37 = arith.constant 0 : index
    %97 = vector.load %arg7[%c16_36, %c0_37] : memref<144x256xf32, #tpu.memory_space<vmem>>, vector<16x256xf32>
    tpu.vector_store %arg7[%c16_36, %c0_37], %96 {strides = array<i32>} : memref<144x256xf32, #tpu.memory_space<vmem>>, vector<16x256xf32>,
    %c15_i32_38 = arith.constant 15 : i32
    %98 = tpu.dynamic_rotate %91 by %c15_i32_38 dim 1 : vector<16x256xf32>, i32 -> vector<16x256xf32>
    %99 = arith.mulf %98, %10 : vector<16x256xf32>
    %c32_39 = arith.constant 32 : index
    %c0_40 = arith.constant 0 : index
    %100 = vector.load %arg7[%c32_39, %c0_40] : memref<144x256xf32, #tpu.memory_space<vmem>>, vector<16x256xf32>
    tpu.vector_store %arg7[%c32_39, %c0_40], %99 {strides = array<i32>} : memref<144x256xf32, #tpu.memory_space<vmem>>, vector<16x256xf32>,
    %c1_i32_41 = arith.constant 1 : i32
    %101 = tpu.dynamic_rotate %91 by %c1_i32_41 dim 1 : vector<16x256xf32>, i32 -> vector<16x256xf32>
    %102 = arith.mulf %101, %13 : vector<16x256xf32>
    %c48_42 = arith.constant 48 : index
    %c0_43 = arith.constant 0 : index
    %103 = vector.load %arg7[%c48_42, %c0_43] : memref<144x256xf32, #tpu.memory_space<vmem>>, vector<16x256xf32>
    tpu.vector_store %arg7[%c48_42, %c0_43], %102 {strides = array<i32>} : memref<144x256xf32, #tpu.memory_space<vmem>>, vector<16x256xf32>,
    %c64_44 = arith.constant 64 : index
    %c0_45 = arith.constant 0 : index
    %104 = vector.load %arg7[%c64_44, %c0_45] : memref<144x256xf32, #tpu.memory_space<vmem>>, vector<16x256xf32>
    tpu.vector_store %arg7[%c64_44, %c0_45], %91 {strides = array<i32>} : memref<144x256xf32, #tpu.memory_space<vmem>>, vector<16x256xf32>,
    %c255_i32_46 = arith.constant 255 : i32
    %105 = tpu.dynamic_rotate %91 by %c255_i32_46 dim 1 : vector<16x256xf32>, i32 -> vector<16x256xf32>
    %106 = arith.mulf %105, %16 : vector<16x256xf32>
    %c80_47 = arith.constant 80 : index
    %c0_48 = arith.constant 0 : index
    %107 = vector.load %arg7[%c80_47, %c0_48] : memref<144x256xf32, #tpu.memory_space<vmem>>, vector<16x256xf32>
    tpu.vector_store %arg7[%c80_47, %c0_48], %106 {strides = array<i32>} : memref<144x256xf32, #tpu.memory_space<vmem>>, vector<16x256xf32>,
    %c241_i32_49 = arith.constant 241 : i32
    %108 = tpu.dynamic_rotate %91 by %c241_i32_49 dim 1 : vector<16x256xf32>, i32 -> vector<16x256xf32>
    %109 = arith.mulf %108, %19 : vector<16x256xf32>
    %c96_50 = arith.constant 96 : index
    %c0_51 = arith.constant 0 : index
    %110 = vector.load %arg7[%c96_50, %c0_51] : memref<144x256xf32, #tpu.memory_space<vmem>>, vector<16x256xf32>
    tpu.vector_store %arg7[%c96_50, %c0_51], %109 {strides = array<i32>} : memref<144x256xf32, #tpu.memory_space<vmem>>, vector<16x256xf32>,
    %c240_i32_52 = arith.constant 240 : i32
    %111 = tpu.dynamic_rotate %91 by %c240_i32_52 dim 1 : vector<16x256xf32>, i32 -> vector<16x256xf32>
    %112 = arith.mulf %111, %22 : vector<16x256xf32>
    %c112_53 = arith.constant 112 : index
    %c0_54 = arith.constant 0 : index
    %113 = vector.load %arg7[%c112_53, %c0_54] : memref<144x256xf32, #tpu.memory_space<vmem>>, vector<16x256xf32>
    tpu.vector_store %arg7[%c112_53, %c0_54], %112 {strides = array<i32>} : memref<144x256xf32, #tpu.memory_space<vmem>>, vector<16x256xf32>,
    %c239_i32_55 = arith.constant 239 : i32
    %114 = tpu.dynamic_rotate %91 by %c239_i32_55 dim 1 : vector<16x256xf32>, i32 -> vector<16x256xf32>
    %115 = arith.mulf %114, %25 : vector<16x256xf32>
    %c128_56 = arith.constant 128 : index
    %c0_57 = arith.constant 0 : index
    %116 = vector.load %arg7[%c128_56, %c0_57] : memref<144x256xf32, #tpu.memory_space<vmem>>, vector<16x256xf32>
    tpu.vector_store %arg7[%c128_56, %c0_57], %115 {strides = array<i32>} : memref<144x256xf32, #tpu.memory_space<vmem>>, vector<16x256xf32>,
    %c0_58 = arith.constant 0 : index
    %c0_59 = arith.constant 0 : index
    %117 = vector.load %arg3[%c0_58, %c0_59] : memref<16x144xf32, #tpu.memory_space<vmem>>, vector<16x144xf32>
    %c0_60 = arith.constant 0 : index
    %c0_61 = arith.constant 0 : index
    %118 = vector.load %arg7[%c0_60, %c0_61] : memref<144x256xf32, #tpu.memory_space<vmem>>, vector<144x256xf32>
    %cst_62 = arith.constant dense<0.000000e+00> : vector<16x256xf32>
    %119 = tpu.matmul %117, %118, %cst_62 {dimension_numbers = #tpu.dot_dimension_numbers<[1], [0], [0], [1], [0, 0, 1, 1], [], []>} : vector<16x144xf32>, vector<144x256xf32>, vector<16x256xf32> -> vector<16x256xf32>
    %120 = arith.addf %119, %27 : vector<16x256xf32>
    %c0_63 = arith.constant 0 : index
    %c0_64 = arith.constant 0 : index
    %c0_65 = arith.constant 0 : index
    %121 = vector.load %arg6[%c0_63, %c0_64, %c0_65] : memref<1x16x256xf32, #tpu.memory_space<vmem>>, vector<1x16x256xf32>
    %122 = vector.shape_cast %121 : vector<1x16x256xf32> to vector<16x256xf32>
    %123 = vector.shape_cast %120 : vector<16x256xf32> to vector<1x16x256xf32>
    tpu.vector_store %arg6[%c0_63, %c0_64, %c0_65], %123 {strides = array<i32>} : memref<1x16x256xf32, #tpu.memory_space<vmem>>, vector<1x16x256xf32>,
    return
  }
  func.func @transform_0(%arg0: i32) -> (i32, i32, i32) {
    %c0_i32 = arith.constant 0 : i32
    %c0_i32_0 = arith.constant 0 : i32
    %c0_i32_1 = arith.constant 0 : i32
    return %arg0, %c0_i32, %c0_i32_0 : i32, i32, i32
  }
  func.func @transform_1(%arg0: i32) -> (i32, i32) {
    %c0_i32 = arith.constant 0 : i32
    %c0_i32_0 = arith.constant 0 : i32
    %c0_i32_1 = arith.constant 0 : i32
    return %c0_i32, %c0_i32_0 : i32, i32
  }
  func.func @transform_2(%arg0: i32) -> (i32, i32) {
    %c0_i32 = arith.constant 0 : i32
    %c0_i32_0 = arith.constant 0 : i32
    %c0_i32_1 = arith.constant 0 : i32
    return %c0_i32, %c0_i32_0 : i32, i32
  }
  func.func @transform_3(%arg0: i32) -> (i32, i32) {
    %c0_i32 = arith.constant 0 : i32
    %c0_i32_0 = arith.constant 0 : i32
    %c0_i32_1 = arith.constant 0 : i32
    return %c0_i32, %c0_i32_0 : i32, i32
  }
  func.func @transform_4(%arg0: i32) -> (i32, i32) {
    %c0_i32 = arith.constant 0 : i32
    %c0_i32_0 = arith.constant 0 : i32
    %c0_i32_1 = arith.constant 0 : i32
    return %c0_i32, %c0_i32_0 : i32, i32
  }
  func.func @transform_5(%arg0: i32) -> (i32, i32, i32) {
    %c0_i32 = arith.constant 0 : i32
    %c0_i32_0 = arith.constant 0 : i32
    %c0_i32_1 = arith.constant 0 : i32
    return %arg0, %c0_i32, %c0_i32_0 : i32, i32, i32
  }
}

</mosaic_0001>

<llo_original>
// kernel: tpu_custom_call.1
$region0: #{tpu_custom_call.1}
  #allocation0 [shape = 'u32[]', space=smem, size = 0x4, offset = 0x4, fixed_abs, tag = 'smem constant byte address 0x4 - core index']
  #allocation1 [shape = 'u32[144,128]{1,0:T(1,128)}', space=vmem, size = 0x12000, scoped, tag = 'internal scratch']
  #allocation2 [shape = 'f32[144,256]{1,0:T(8,128)}', space=vmem, size = 0x24000, scoped, tag = 'scratch operand']
  %s0 = inlined_call_operand.hbm [shape: f32[2,16,256], index: 0, kind: input, shape index: {}]
  %s1 = inlined_call_operand.hbm [shape: f32[16,144], index: 1, kind: input, shape index: {}]
  %s2 = inlined_call_operand.hbm [shape: f32[16,144], index: 2, kind: input, shape index: {}]
  %s3 = inlined_call_operand.hbm [shape: f32[16,16], index: 3, kind: input, shape index: {}]
  %s4 = inlined_call_operand.hbm [shape: f32[8,256], index: 4, kind: input, shape index: {}]
  %s5 = inlined_call_operand.hbm [shape: f32[2,16,256], index: 5, kind: output, shape index: {}]
  %s6 = sld [smem:[#allocation0]]
  $region73: #{tpu_custom_call.1} parent=0
    _
  %s8 = ssub.s32 1, %s6
  %s9 = scalar_select 0, %s8, %s6
  $region1: #{tpu_custom_call.1} parent=0
    #allocation3 [shape = 'u8[32768]{0}', space=vmem, size = 0x8000, scoped, tag = 'input window, operand 0']
    #allocation4 [shape = 's32[2]{0}', space=sflag, size = 0x8, scoped, tag = 'scoped memory for tpu_custom_call.1']
    #allocation5 [shape = 's32[2]{0}', space=sflag, size = 0x8, scoped, tag = 'scoped memory for tpu_custom_call.1']
    #allocation6 [shape = 'u8[16384]{0}', space=vmem, size = 0x4000, scoped, tag = 'input window, operand 1, single buffered']
    #allocation7 [shape = 's32[1]{0}', space=sflag, size = 0x4, scoped, tag = 'scoped memory for tpu_custom_call.1']
    #allocation8 [shape = 'u8[16384]{0}', space=vmem, size = 0x4000, scoped, tag = 'input window, operand 2, single buffered']
    #allocation9 [shape = 'u8[8192]{0}', space=vmem, size = 0x2000, scoped, tag = 'input window, operand 3, single buffered']
    #allocation10 [shape = 's32[1]{0}', space=sflag, size = 0x4, scoped, tag = 'scoped memory for tpu_custom_call.1']
    #allocation11 [shape = 'u8[8192]{0}', space=vmem, size = 0x2000, scoped, tag = 'input window, operand 4, single buffered']
    #allocation12 [shape = 'u8[32768]{0}', space=vmem, size = 0x8000, scoped, tag = 'output window, operand 0']
    %10 = vsyncpa [#allocation4], 0
    %s11 = scalar_lea.sflag [#allocation4], 1
    %12 = vsyncpa %s11, 0
    %13 = vsyncpa [#allocation7], 0
    %14 = vsyncpa [#allocation10], 0
    %15 = vsyncpa [#allocation5], 0
    %s16 = scalar_lea.sflag [#allocation5], 1
    %17 = vsyncpa %s16, 0
    loop: start=0, step=1, limit=4
    $region2: #{tpu_custom_call.1} parent=1 // loop_pre_header
      _
    $region3: #{tpu_custom_call.1} parent=1 // loop_header
      %s19 = sphi 0, %s23
      %p20 = scmp.ge.s32.totalorder %s19, 4
      %s29 = sphi 0, %s31
      %s32 = sphi 0, %s29
      %s33 = sphi 0, %s32
      %s49 = sphi 0, %s33
      %s53 = sphi 0, %s53
      %s55 = sphi 0, %s53
      %s56 = sphi 0, %s55
      %s70 = sphi 0, %s56
      %s74 = sphi 0, %s74
      %s76 = sphi 0, %s74
      %s77 = sphi 0, %s76
      %s91 = sphi 0, %s77
      %s95 = sphi 0, %s95
      %s97 = sphi 0, %s95
      %s98 = sphi 0, %s97
      %s112 = sphi 0, %s98
      %s116 = sphi 0, %s116
      %s118 = sphi 0, %s116
      %s119 = sphi 0, %s118
      %s133 = sphi 0, %s119
      %s139 = sphi 0, %s141
      %s142 = sphi 0, %s139
      %s143 = sphi 0, %s142
      %s159 = sphi 0, %s143
    $region4: #{tpu_custom_call.1} parent=1 // loop_header_branch
      %22 = sbr.rel (%p20) target = $region8
    $region5: #{tpu_custom_call.1} parent=1 // loop_body
      %s24 = ssub.s32 %s19, 1
      %s25 = ssub.s32 %s19, 2
      %s26 = sadd.s32 %s19, 1
      %s27 = ssub.s32 %s19, %s26
      %p28 = scmp.eq.s32.totalorder %s27, 0
      %s30 = sadd.s32 %s29, 1
      %s31 = scalar_select %p28, %s29, %s30
      %p34 = pneg %p28
      %p35 = scmp.eq.s32.totalorder %s19, 1
      %p36 = por %p34, %p35
      %p37 = scmp.ne.s32.totalorder %s29, %s32
      %p38 = scmp.eq.s32.totalorder %s19, 0
      %p39 = por %p37, %p38
      %p40 = scmp.ne.s32.totalorder %s29, %s32
      %p41 = scmp.eq.s32.totalorder %s24, 1
      %p42 = por %p40, %p41
      %p43 = scmp.ne.s32.totalorder %s32, %s33
      %p44 = scmp.eq.s32.totalorder %s24, 0
      %p45 = por %p43, %p44
      %p46 = scmp.ne.s32.totalorder %s32, %s33
      %p47 = scmp.eq.s32.totalorder %s25, 1
      %p48 = por %p46, %p47
      %p50 = scmp.ne.s32.totalorder %s33, %s49
      %p51 = scmp.eq.s32.totalorder %s25, 0
      %p52 = por %p50, %p51
      %s54 = sadd.s32 %s53, 1
      %p57 = scmp.eq.s32.totalorder %s19, 1
      %p58 = scmp.ne.s32.totalorder %s53, %s55
      %p59 = scmp.eq.s32.totalorder %s19, 0
      %p60 = por %p58, %p59
      %p61 = scmp.ne.s32.totalorder %s53, %s55
      %p62 = scmp.eq.s32.totalorder %s24, 1
      %p63 = por %p61, %p62
      %p64 = scmp.ne.s32.totalorder %s55, %s56
      %p65 = scmp.eq.s32.totalorder %s24, 0
      %p66 = por %p64, %p65
      %p67 = scmp.ne.s32.totalorder %s55, %s56
      %p68 = scmp.eq.s32.totalorder %s25, 1
      %p69 = por %p67, %p68
      %p71 = scmp.ne.s32.totalorder %s56, %s70
      %p72 = scmp.eq.s32.totalorder %s25, 0
      %p73 = por %p71, %p72
      %s75 = sadd.s32 %s74, 1
      %p78 = scmp.eq.s32.totalorder %s19, 1
      %p79 = scmp.ne.s32.totalorder %s74, %s76
      %p80 = scmp.eq.s32.totalorder %s19, 0
      %p81 = por %p79, %p80
      %p82 = scmp.ne.s32.totalorder %s74, %s76
      %p83 = scmp.eq.s32.totalorder %s24, 1
      %p84 = por %p82, %p83
      %p85 = scmp.ne.s32.totalorder %s76, %s77
      %p86 = scmp.eq.s32.totalorder %s24, 0
      %p87 = por %p85, %p86
      %p88 = scmp.ne.s32.totalorder %s76, %s77
      %p89 = scmp.eq.s32.totalorder %s25, 1
      %p90 = por %p88, %p89
      %p92 = scmp.ne.s32.totalorder %s77, %s91
      %p93 = scmp.eq.s32.totalorder %s25, 0
      %p94 = por %p92, %p93
      %s96 = sadd.s32 %s95, 1
      %p99 = scmp.eq.s32.totalorder %s19, 1
      %p100 = scmp.ne.s32.totalorder %s95, %s97
      %p101 = scmp.eq.s32.totalorder %s19, 0
      %p102 = por %p100, %p101
      %p103 = scmp.ne.s32.totalorder %s95, %s97
      %p104 = scmp.eq.s32.totalorder %s24, 1
      %p105 = por %p103, %p104
      %p106 = scmp.ne.s32.totalorder %s97, %s98
      %p107 = scmp.eq.s32.totalorder %s24, 0
      %p108 = por %p106, %p107
      %p109 = scmp.ne.s32.totalorder %s97, %s98
      %p110 = scmp.eq.s32.totalorder %s25, 1
      %p111 = por %p109, %p110
      %p113 = scmp.ne.s32.totalorder %s98, %s112
      %p114 = scmp.eq.s32.totalorder %s25, 0
      %p115 = por %p113, %p114
      %s117 = sadd.s32 %s116, 1
      %p120 = scmp.eq.s32.totalorder %s19, 1
      %p121 = scmp.ne.s32.totalorder %s116, %s118
      %p122 = scmp.eq.s32.totalorder %s19, 0
      %p123 = por %p121, %p122
      %p124 = scmp.ne.s32.totalorder %s116, %s118
      %p125 = scmp.eq.s32.totalorder %s24, 1
      %p126 = por %p124, %p125
      %p127 = scmp.ne.s32.totalorder %s118, %s119
      %p128 = scmp.eq.s32.totalorder %s24, 0
      %p129 = por %p127, %p128
      %p130 = scmp.ne.s32.totalorder %s118, %s119
      %p131 = scmp.eq.s32.totalorder %s25, 1
      %p132 = por %p130, %p131
      %p134 = scmp.ne.s32.totalorder %s119, %s133
      %p135 = scmp.eq.s32.totalorder %s25, 0
      %p136 = por %p134, %p135
      %s137 = ssub.s32 %s19, %s26
      %p138 = scmp.eq.s32.totalorder %s137, 0
      %s140 = sadd.s32 %s139, 1
      %s141 = scalar_select %p138, %s139, %s140
      %p144 = pneg %p138
      %p145 = scmp.eq.s32.totalorder %s19, 1
      %p146 = por %p144, %p145
      %p147 = scmp.ne.s32.totalorder %s139, %s142
      %p148 = scmp.eq.s32.totalorder %s19, 0
      %p149 = por %p147, %p148
      %p150 = scmp.ne.s32.totalorder %s139, %s142
      %p151 = scmp.eq.s32.totalorder %s24, 1
      %p152 = por %p150, %p151
      %p153 = scmp.ne.s32.totalorder %s142, %s143
      %p154 = scmp.eq.s32.totalorder %s24, 0
      %p155 = por %p153, %p154
      %p156 = scmp.ne.s32.totalorder %s142, %s143
      %p157 = scmp.eq.s32.totalorder %s25, 1
      %p158 = por %p156, %p157
      %p160 = scmp.ne.s32.totalorder %s143, %s159
      %p161 = scmp.eq.s32.totalorder %s25, 0
      %p162 = por %p160, %p161
      %p163 = scmp.le.s32.totalorder 1, %s19
      %p164 = scmp.lt.s32.totalorder %s19, 3
      %p165 = pnand %p163, %p164
      %p166 = pneg %p165
      // Predicated region
      $region9: #{tpu_custom_call.1} parent=5 // pred_check
        _
      $region10: #{tpu_custom_call.1} parent=5 // pred_check_branch
        %168 = sbr.rel (%p165) target = $region12
      $region11: #{tpu_custom_call.1} parent=5 // pred_region
        %s169 = ssub.s32 %s19, 1
        // Predicated region
        $region13: #{tpu_custom_call.1} parent=11 // pred_check
          %p170 = pneg %p66
        $region14: #{tpu_custom_call.1} parent=11 // pred_check_branch
          %172 = sbr.rel (%p170) target = $region16
        $region15: #{tpu_custom_call.1} parent=11 // pred_region
          %s174 = ssub.s32 512, 512
          %175 = vsyncadd [#allocation7], %s174
          %s176 = sshll.u32 [#allocation6], 4
          %s177 = int_to_ptr.vmem [resolvable:$true] %s176
          %182 = dma.hbm_to_vmem [thread:$0]  %s1, 512, %s177, [#allocation7], 256, 256, 16
        $region16: #{tpu_custom_call.1} parent=11 // pred_fallthru
          _
        // Predicated region
        $region17: #{tpu_custom_call.1} parent=11 // pred_check
          %p183 = pneg %p87
        $region18: #{tpu_custom_call.1} parent=11 // pred_check_branch
          %185 = sbr.rel (%p183) target = $region20
        $region19: #{tpu_custom_call.1} parent=11 // pred_region
          %s187 = ssub.s32 512, 512
          %188 = vsyncadd [#allocation7], %s187
          %s189 = sshll.u32 [#allocation8], 4
          %s190 = int_to_ptr.vmem [resolvable:$true] %s189
          %195 = dma.hbm_to_vmem [thread:$0]  %s2, 512, %s190, [#allocation7], 256, 256, 16
        $region20: #{tpu_custom_call.1} parent=11 // pred_fallthru
          _
        // Predicated region
        $region21: #{tpu_custom_call.1} parent=11 // pred_check
          %p196 = pneg %p108
        $region22: #{tpu_custom_call.1} parent=11 // pred_check_branch
          %198 = sbr.rel (%p196) target = $region24
        $region23: #{tpu_custom_call.1} parent=11 // pred_region
          %s200 = ssub.s32 256, 256
          %201 = vsyncadd [#allocation10], %s200
          %s202 = sshll.u32 [#allocation9], 4
          %s203 = int_to_ptr.vmem [resolvable:$true] %s202
          %208 = dma.hbm_to_vmem [thread:$0]  %s3, 256, %s203, [#allocation10], 128, 128, 8
        $region24: #{tpu_custom_call.1} parent=11 // pred_fallthru
          _
        // Predicated region
        $region25: #{tpu_custom_call.1} parent=11 // pred_check
          %p209 = pneg %p129
        $region26: #{tpu_custom_call.1} parent=11 // pred_check_branch
          %211 = sbr.rel (%p209) target = $region28
        $region27: #{tpu_custom_call.1} parent=11 // pred_region
          %s213 = ssub.s32 256, 256
          %214 = vsyncadd [#allocation10], %s213
          %s216 = sshll.u32 [#allocation11], 4
          %s217 = int_to_ptr.vmem [resolvable:$true] %s216
          %219 = dma.hbm_to_vmem [thread:$0]  %s4, 256, %s217, [#allocation10]
        $region28: #{tpu_custom_call.1} parent=11 // pred_fallthru
          _
      $region12: #{tpu_custom_call.1} parent=5 // pred_fallthru
        _
      %p220 = scmp.lt.s32.totalorder %s19, 2
      // Predicated region
      $region29: #{tpu_custom_call.1} parent=5 // pred_check
        %p221 = pneg %p220
      $region30: #{tpu_custom_call.1} parent=5 // pred_check_branch
        %223 = sbr.rel (%p221) target = $region32
      $region31: #{tpu_custom_call.1} parent=5 // pred_region
        // Predicated region
        $region33: #{tpu_custom_call.1} parent=31 // pred_check
          %p224 = pneg %p39
        $region34: #{tpu_custom_call.1} parent=31 // pred_check_branch
          %226 = sbr.rel (%p224) target = $region36
        $region35: #{tpu_custom_call.1} parent=31 // pred_region
          %s227 = sand.u32 %s29, 1
          %s228 = scalar_lea.sflag [#allocation4], %s227
          %s229 = sand.u32 %s29, 1
          %s230 = smul.addr %s229, 32
          %s231 = scalar_lea.vmem [#allocation3], %s230
          %s233 = ssub.s32 512, 512
          %234 = vsyncadd %s228, %s233
          %s235 = smul.addr %s19, 4
          %s236 = smul.addr %s235, 128
          %s237 = scalar_lea.hbm %s0, %s236
          %s238 = sshll.u32 %s231, 4
          %s239 = int_to_ptr.vmem [resolvable:$true] %s238
          %244 = dma.hbm_to_vmem [thread:$0]  %s237, 512, %s239, %s228, 256, 256, 16
        $region36: #{tpu_custom_call.1} parent=31 // pred_fallthru
          _
      $region32: #{tpu_custom_call.1} parent=5 // pred_fallthru
        _
      %p245 = scmp.le.s32.totalorder 1, %s19
      %p246 = scmp.lt.s32.totalorder %s19, 3
      %p247 = pnand %p245, %p246
      %p248 = pneg %p247
      // Predicated region
      $region37: #{tpu_custom_call.1} parent=5 // pred_check
        _
      $region38: #{tpu_custom_call.1} parent=5 // pred_check_branch
        %250 = sbr.rel (%p247) target = $region40
      $region39: #{tpu_custom_call.1} parent=5 // pred_region
        %s251 = ssub.s32 %s19, 1
        %s252 = sand.u32 %s32, 1
        %s253 = scalar_lea.sflag [#allocation4], %s252
        %s254 = sand.u32 %s32, 1
        %s255 = smul.addr %s254, 32
        %s256 = scalar_lea.vmem [#allocation3], %s255
        // Predicated region
        $region41: #{tpu_custom_call.1} parent=39 // pred_check
          %p257 = pneg %p45
        $region42: #{tpu_custom_call.1} parent=39 // pred_check_branch
          %259 = sbr.rel (%p257) target = $region44
        $region43: #{tpu_custom_call.1} parent=39 // pred_region
          %260 = dma.done %s253, 512
        $region44: #{tpu_custom_call.1} parent=39 // pred_fallthru
          _
        // Predicated region
        $region45: #{tpu_custom_call.1} parent=39 // pred_check
          %p261 = pneg %p66
        $region46: #{tpu_custom_call.1} parent=39 // pred_check_branch
          %263 = sbr.rel (%p261) target = $region48
        $region47: #{tpu_custom_call.1} parent=39 // pred_region
          %264 = dma.done [#allocation7], 512
        $region48: #{tpu_custom_call.1} parent=39 // pred_fallthru
          _
        // Predicated region
        $region49: #{tpu_custom_call.1} parent=39 // pred_check
          %p265 = pneg %p87
        $region50: #{tpu_custom_call.1} parent=39 // pred_check_branch
          %267 = sbr.rel (%p265) target = $region52
        $region51: #{tpu_custom_call.1} parent=39 // pred_region
          %268 = dma.done [#allocation7], 512
        $region52: #{tpu_custom_call.1} parent=39 // pred_fallthru
          _
        // Predicated region
        $region53: #{tpu_custom_call.1} parent=39 // pred_check
          %p269 = pneg %p108
        $region54: #{tpu_custom_call.1} parent=39 // pred_check_branch
          %271 = sbr.rel (%p269) target = $region56
        $region55: #{tpu_custom_call.1} parent=39 // pred_region
          %272 = dma.done [#allocation10], 256
        $region56: #{tpu_custom_call.1} parent=39 // pred_fallthru
          _
        // Predicated region
        $region57: #{tpu_custom_call.1} parent=39 // pred_check
          %p273 = pneg %p129
        $region58: #{tpu_custom_call.1} parent=39 // pred_check_branch
          %275 = sbr.rel (%p273) target = $region60
        $region59: #{tpu_custom_call.1} parent=39 // pred_region
          %276 = dma.done [#allocation10], 256
        $region60: #{tpu_custom_call.1} parent=39 // pred_fallthru
          _
        %s277 = sand.u32 %s32, 1
        %s278 = scalar_lea.sflag [#allocation4], %s277
        %s279 = sand.u32 %s32, 1
        %s280 = smul.addr %s279, 32
        %s281 = scalar_lea.vmem [#allocation3], %s280
        %p282 = pneg %p45
        %p283 = pneg %p42
        %p284 = pneg %p66
        %p285 = pneg %p63
        %p286 = pneg %p87
        %p287 = pneg %p84
        %p288 = pneg %p108
        %p289 = pneg %p105
        %p290 = pneg %p129
        %p291 = pneg %p126
        %p292 = pneg %p155
        %p293 = pneg %p152
        %s294 = sand.u32 %s142, 1
        %s295 = scalar_lea.sflag [#allocation5], %s294
        %s296 = sand.u32 %s142, 1
        %s297 = smul.addr %s296, 32
        %s298 = scalar_lea.vmem [#allocation12], %s297
        %v299 = vld [vmem:[#allocation9] sm:$0xff]
        %v300 = vld [vmem:[#allocation9 + $0x8] sm:$0xff]
        %v301 = vld [vmem:[#allocation11] sm:$0xff]
        %v302 = vld [vmem:[#allocation11 + $0x8] sm:$0xff]
        %v303 = vlaneseq
        %v304 = vshrl.u32 %v303, 7
        %v305 = vsub.s32 0, %v304
        %v306 = vrot.slane %v301, %v305
        %v307 = vlaneseq
        %v308 = vshrl.u32 %v307, 7
        %v309 = vsub.s32 0, %v308
        %v310 = vrot.slane %v302, %v309
        %v311 = vlaneseq
        %v312 = vshrl.u32 %v311, 7
        %v313 = vsub.s32 1, %v312
        %v314 = vrot.slane %v301, %v313
        %v315 = vlaneseq
        %v316 = vshrl.u32 %v315, 7
        %v317 = vsub.s32 1, %v316
        %v318 = vrot.slane %v302, %v317
        %v319 = vlaneseq
        %v320 = vshrl.u32 %v319, 7
        %v321 = vsub.s32 2, %v320
        %v322 = vrot.slane %v301, %v321
        %v323 = vlaneseq
        %v324 = vshrl.u32 %v323, 7
        %v325 = vsub.s32 2, %v324
        %v326 = vrot.slane %v302, %v325
        %v327 = vlaneseq
        %v328 = vshrl.u32 %v327, 7
        %v329 = vsub.s32 3, %v328
        %v330 = vrot.slane %v301, %v329
        %v331 = vlaneseq
        %v332 = vshrl.u32 %v331, 7
        %v333 = vsub.s32 3, %v332
        %v334 = vrot.slane %v302, %v333
        %v335 = vlaneseq
        %v336 = vshrl.u32 %v335, 7
        %v337 = vsub.s32 4, %v336
        %v338 = vrot.slane %v301, %v337
        %v339 = vlaneseq
        %v340 = vshrl.u32 %v339, 7
        %v341 = vsub.s32 4, %v340
        %v342 = vrot.slane %v302, %v341
        %v343 = vlaneseq
        %v344 = vshrl.u32 %v343, 7
        %v345 = vsub.s32 5, %v344
        %v346 = vrot.slane %v301, %v345
        %v347 = vlaneseq
        %v348 = vshrl.u32 %v347, 7
        %v349 = vsub.s32 5, %v348
        %v350 = vrot.slane %v302, %v349
        %v351 = vlaneseq
        %v352 = vshrl.u32 %v351, 7
        %v353 = vsub.s32 6, %v352
        %v354 = vrot.slane %v301, %v353
        %v355 = vlaneseq
        %v356 = vshrl.u32 %v355, 7
        %v357 = vsub.s32 6, %v356
        %v358 = vrot.slane %v302, %v357
        %v359 = vlaneseq
        %v360 = vshrl.u32 %v359, 7
        %v361 = vsub.s32 7, %v360
        %v362 = vrot.slane %v301, %v361
        %v363 = vlaneseq
        %v364 = vshrl.u32 %v363, 7
        %v365 = vsub.s32 7, %v364
        %v366 = vrot.slane %v302, %v365
        %v367 = vld [vmem:[%s256] sm:$0xff]
        %v368 = vld [vmem:[%s256 + $0x8] sm:$0xff]
        %v369 = vld [vmem:[%s256 + $0x10] sm:$0xff]
        %v370 = vld [vmem:[%s256 + $0x18] sm:$0xff]
        %v371 = vadd.f32 %v367, %v368
        %372 = vadd.xlane.f32.xlu0 %v371
        %v373 = vpop.xlane.xlu0 %372
        %v374 = vadd.f32 %v369, %v370
        %375 = vadd.xlane.f32.xlu0 %v374
        %v376 = vpop.xlane.xlu0 %375
        %v377 = vmul.f32 %v367, %v367
        %v378 = vmul.f32 %v368, %v368
        %v379 = vmul.f32 %v369, %v369
        %v380 = vmul.f32 %v370, %v370
        %v381 = vadd.f32 %v377, %v378
        %382 = vadd.xlane.f32.xlu0 %v381
        %v383 = vpop.xlane.xlu0 %382
        %v384 = vadd.f32 %v379, %v380
        %385 = vadd.xlane.f32.xlu0 %v384
        %v386 = vpop.xlane.xlu0 %385
        %vm387 = vcmask 130048
        %v389 = vsel %vm387, %v299, 0
        %v392 = vsel %vm387, %v300, 0
        %394 = vmatprep.subr.mxu0 0.0
        %395 = vmatpush1.msra.mxu0 %v373
        %396 = vmatprep.subr.mxu0 0.0
        %397 = vmatpush1.msra.mxu0 %v376
        %398 = vmatprep.subr.mxu0 0.0
        %399 = vmatpush1.msra.mxu0 0.0
        %400 = vmatprep.subr.mxu0 0.0
        %401 = vmatpush1.msra.mxu0 0.0
        %402 = vmatprep.subr.mxu0 0.0
        %403 = vmatpush1.msra.mxu0 0.0
        %404 = vmatprep.subr.mxu0 0.0
        %405 = vmatpush1.msra.mxu0 0.0
        %406 = vmatprep.subr.mxu0 0.0
        %407 = vmatpush1.msra.mxu0 0.0
        %408 = vmatprep.subr.mxu0 0.0
        %409 = vmatpush1.msra.mxu0 0.0
        %410 = vmatprep.subr.mxu0 0.0
        %411 = vmatpush1.msra.mxu0 0.0
        %412 = vmatprep.subr.mxu0 0.0
        %413 = vmatpush1.msra.mxu0 0.0
        %414 = vmatprep.subr.mxu0 0.0
        %415 = vmatpush1.msra.mxu0 0.0
        %416 = vmatprep.subr.mxu0 0.0
        %417 = vmatpush1.msra.mxu0 0.0
        %418 = vmatprep.subr.mxu0 0.0
        %419 = vmatpush1.msra.mxu0 0.0
        %420 = vmatprep.subr.mxu0 0.0
        %421 = vmatpush1.msra.mxu0 0.0
        %422 = vmatprep.subr.mxu0 0.0
        %423 = vmatpush1.msra.mxu0 0.0
        %424 = vmatprep.subr.mxu0 0.0
        %425 = vmatpush1.msra.mxu0 0.0
        %426 = vmatprep.subr.mxu0 0.0
        %427 = vmatpush1.msra.mxu0 0.0
        %428 = vmatprep.subr.mxu0 0.0
        %429 = vmatpush1.msra.mxu0 0.0
        %430 = vmatprep.subr.mxu0 0.0
        %431 = vmatpush1.msra.mxu0 0.0
        %432 = vmatprep.subr.mxu0 0.0
        %433 = vmatpush1.msra.mxu0 0.0
        %434 = vmatprep.subr.mxu0 0.0
        %435 = vmatpush1.msra.mxu0 0.0
        %436 = vmatprep.subr.mxu0 0.0
        %437 = vmatpush1.msra.mxu0 0.0
        %438 = vmatprep.subr.mxu0 0.0
        %439 = vmatpush1.msra.mxu0 0.0
        %440 = vmatprep.subr.mxu0 0.0
        %441 = vmatpush1.msra.mxu0 0.0
        %442 = vmatprep.subr.mxu0 0.0
        %443 = vmatpush1.msra.mxu0 0.0
        %444 = vmatprep.subr.mxu0 0.0
        %445 = vmatpush1.msra.mxu0 0.0
        %446 = vmatprep.subr.mxu0 0.0
        %447 = vmatpush1.msra.mxu0 0.0
        %448 = vmatprep.subr.mxu0 0.0
        %449 = vmatpush1.msra.mxu0 0.0
        %450 = vmatprep.subr.mxu0 0.0
        %451 = vmatpush1.msra.mxu0 0.0
        %452 = vmatprep.subr.mxu0 0.0
        %453 = vmatpush1.msra.mxu0 0.0
        %454 = vmatprep.subr.mxu0 0.0
        %455 = vmatpush1.msra.mxu0 0.0
        %456 = vmatprep.subr.mxu0 0.0
        %457 = vmatpush1.msra.mxu0 0.0
        %458 = vmatprep.mubr.f32.mxu0 0.0
        %459 = vmatmul.mubr.f32.gmra.mrb[0].mxu0 %v389
        %v460 = vpop.f32.mrb[0].mxu0
        %v461 = vadd.f32 0.0, %v460
        %v462 = vpop.f32.mrb[0].mxu0
        %463 = vmatprep.mubr.f32.mxu0 0.0
        %464 = vmatmul.mubr.f32.gmra.mrb[0].mxu0 %v392
        %v465 = vpop.f32.mrb[0].mxu0
        %v466 = vadd.f32 0.0, %v465
        %v467 = vpop.f32.mrb[0].mxu0
        %468 = vdwg.mxu0
        %469 = vmatprep.subr.mxu0 0.0
        %470 = vmatpush1.msra.mxu0 %v383
        %471 = vmatprep.subr.mxu0 0.0
        %472 = vmatpush1.msra.mxu0 %v386
        %473 = vmatprep.subr.mxu0 0.0
        %474 = vmatpush1.msra.mxu0 0.0
        %475 = vmatprep.subr.mxu0 0.0
        %476 = vmatpush1.msra.mxu0 0.0
        %477 = vmatprep.subr.mxu0 0.0
        %478 = vmatpush1.msra.mxu0 0.0
        %479 = vmatprep.subr.mxu0 0.0
        %480 = vmatpush1.msra.mxu0 0.0
        %481 = vmatprep.subr.mxu0 0.0
        %482 = vmatpush1.msra.mxu0 0.0
        %483 = vmatprep.subr.mxu0 0.0
        %484 = vmatpush1.msra.mxu0 0.0
        %485 = vmatprep.subr.mxu0 0.0
        %486 = vmatpush1.msra.mxu0 0.0
        %487 = vmatprep.subr.mxu0 0.0
        %488 = vmatpush1.msra.mxu0 0.0
        %489 = vmatprep.subr.mxu0 0.0
        %490 = vmatpush1.msra.mxu0 0.0
        %491 = vmatprep.subr.mxu0 0.0
        %492 = vmatpush1.msra.mxu0 0.0
        %493 = vmatprep.subr.mxu0 0.0
        %494 = vmatpush1.msra.mxu0 0.0
        %495 = vmatprep.subr.mxu0 0.0
        %496 = vmatpush1.msra.mxu0 0.0
        %497 = vmatprep.subr.mxu0 0.0
        %498 = vmatpush1.msra.mxu0 0.0
        %499 = vmatprep.subr.mxu0 0.0
        %500 = vmatpush1.msra.mxu0 0.0
        %501 = vmatprep.subr.mxu0 0.0
        %502 = vmatpush1.msra.mxu0 0.0
        %503 = vmatprep.subr.mxu0 0.0
        %504 = vmatpush1.msra.mxu0 0.0
        %505 = vmatprep.subr.mxu0 0.0
        %506 = vmatpush1.msra.mxu0 0.0
        %507 = vmatprep.subr.mxu0 0.0
        %508 = vmatpush1.msra.mxu0 0.0
        %509 = vmatprep.subr.mxu0 0.0
        %510 = vmatpush1.msra.mxu0 0.0
        %511 = vmatprep.subr.mxu0 0.0
        %512 = vmatpush1.msra.mxu0 0.0
        %513 = vmatprep.subr.mxu0 0.0
        %514 = vmatpush1.msra.mxu0 0.0
        %515 = vmatprep.subr.mxu0 0.0
        %516 = vmatpush1.msra.mxu0 0.0
        %517 = vmatprep.subr.mxu0 0.0
        %518 = vmatpush1.msra.mxu0 0.0
        %519 = vmatprep.subr.mxu0 0.0
        %520 = vmatpush1.msra.mxu0 0.0
        %521 = vmatprep.subr.mxu0 0.0
        %522 = vmatpush1.msra.mxu0 0.0
        %523 = vmatprep.subr.mxu0 0.0
        %524 = vmatpush1.msra.mxu0 0.0
        %525 = vmatprep.subr.mxu0 0.0
        %526 = vmatpush1.msra.mxu0 0.0
        %527 = vmatprep.subr.mxu0 0.0
        %528 = vmatpush1.msra.mxu0 0.0
        %529 = vmatprep.subr.mxu0 0.0
        %530 = vmatpush1.msra.mxu0 0.0
        %531 = vmatprep.subr.mxu0 0.0
        %532 = vmatpush1.msra.mxu0 0.0
        %533 = vmatprep.mubr.f32.mxu0 0.0
        %534 = vmatmul.mubr.f32.gmra.mrb[0].mxu0 %v389
        %v535 = vpop.f32.mrb[0].mxu0
        %v536 = vadd.f32 0.0, %v535
        %v537 = vpop.f32.mrb[0].mxu0
        %538 = vmatprep.mubr.f32.mxu0 0.0
        %539 = vmatmul.mubr.f32.gmra.mrb[0].mxu0 %v392
        %v540 = vpop.f32.mrb[0].mxu0
        %v541 = vadd.f32 0.0, %v540
        %v542 = vpop.f32.mrb[0].mxu0
        %543 = vdwg.mxu0
        %v544 = vmul.f32 %v461, %v461
        %v545 = vmul.f32 %v466, %v466
        %v546 = vsub.f32 %v536, %v544
        %v547 = vsub.f32 %v541, %v545
        %549 = vset.pattern.permute.xlu0 0
        %550 = vperm.xlu0 %549, %v461
        %v551 = vpop.permute.xlu0 %550
        %554 = vset.pattern.permute.xlu0 0
        %555 = vperm.xlu0 %554, %v466
        %v556 = vpop.permute.xlu0 %555
        %v558 = vsub.f32 %v367, %v551
        %v559 = vsub.f32 %v368, %v551
        %v560 = vsub.f32 %v369, %v556
        %v561 = vsub.f32 %v370, %v556
        %v562 = vadd.f32 %v546, 1e-05
        %v563 = vadd.f32 %v547, 1e-05
        %v564 = vrsqrt.pop %v562
        %v565 = vrsqrt.pop %v563
        %567 = vset.pattern.permute.xlu0 0
        %568 = vperm.xlu0 %567, %v564
        %v569 = vpop.permute.xlu0 %568
        %572 = vset.pattern.permute.xlu0 0
        %573 = vperm.xlu0 %572, %v565
        %v574 = vpop.permute.xlu0 %573
        %v576 = vmul.f32 %v558, %v569
        %v577 = vmul.f32 %v559, %v569
        %v578 = vmul.f32 %v560, %v574
        %v579 = vmul.f32 %v561, %v574
        %v580 = vmax.f32 %v576, 0.0
        %v581 = vmax.f32 %v577, 0.0
        %v582 = vmax.f32 %v578, 0.0
        %v583 = vmax.f32 %v579, 0.0
        %584 = vrot.lane.b32.xlu0 %v580, 17
        %v585 = vpop.permute.xlu0 %584
        %586 = vrot.lane.b32.xlu0 %v582, 17
        %v587 = vpop.permute.xlu0 %586
        %588 = vrot.lane.b32.xlu0 %v581, 17
        %v589 = vpop.permute.xlu0 %588
        %590 = vrot.lane.b32.xlu0 %v583, 17
        %v591 = vpop.permute.xlu0 %590
        %v592 = vlaneseq
        %v593 = vand.u32 %v592, 127
        %vm594 = vcmp.lt.s32.totalorder %v593, 17
        %v595 = vsel %vm594, %v585, %v589
        %v596 = vsel %vm594, %v587, %v591
        %v597 = vsel %vm594, %v589, %v585
        %v598 = vsel %vm594, %v591, %v587
        %v599 = vmul.f32 %v597, %v306
        %v600 = vmul.f32 %v595, %v310
        %v601 = vmul.f32 %v598, %v306
        %v602 = vmul.f32 %v596, %v310
        %603 = vst [vmem:[#allocation2] sm:$0xff] %v599
        %604 = vst [vmem:[#allocation2 + $0x8] sm:$0xff] %v600
        %605 = vst [vmem:[#allocation2 + $0x10] sm:$0xff] %v601
        %606 = vst [vmem:[#allocation2 + $0x18] sm:$0xff] %v602
        %607 = vrot.lane.b32.xlu0 %v580, 16
        %v608 = vpop.permute.xlu0 %607
        %609 = vrot.lane.b32.xlu0 %v582, 16
        %v610 = vpop.permute.xlu0 %609
        %611 = vrot.lane.b32.xlu0 %v581, 16
        %v612 = vpop.permute.xlu0 %611
        %613 = vrot.lane.b32.xlu0 %v583, 16
        %v614 = vpop.permute.xlu0 %613
        %vm615 = vcmp.lt.s32.totalorder %v593, 16
        %v616 = vsel %vm615, %v608, %v612
        %v617 = vsel %vm615, %v610, %v614
        %v618 = vsel %vm615, %v612, %v608
        %v619 = vsel %vm615, %v614, %v610
        %v620 = vmul.f32 %v618, %v314
        %v621 = vmul.f32 %v616, %v318
        %v622 = vmul.f32 %v619, %v314
        %v623 = vmul.f32 %v617, %v318
        %624 = vst [vmem:[#allocation2 + $0x20] sm:$0xff] %v620
        %625 = vst [vmem:[#allocation2 + $0x28] sm:$0xff] %v621
        %626 = vst [vmem:[#allocation2 + $0x30] sm:$0xff] %v622
        %627 = vst [vmem:[#allocation2 + $0x38] sm:$0xff] %v623
        %628 = vrot.lane.b32.xlu0 %v580, 15
        %v629 = vpop.permute.xlu0 %628
        %630 = vrot.lane.b32.xlu0 %v582, 15
        %v631 = vpop.permute.xlu0 %630
        %632 = vrot.lane.b32.xlu0 %v581, 15
        %v633 = vpop.permute.xlu0 %632
        %634 = vrot.lane.b32.xlu0 %v583, 15
        %v635 = vpop.permute.xlu0 %634
        %vm636 = vcmp.lt.s32.totalorder %v593, 15
        %v637 = vsel %vm636, %v629, %v633
        %v638 = vsel %vm636, %v631, %v635
        %v639 = vsel %vm636, %v633, %v629
        %v640 = vsel %vm636, %v635, %v631
        %v641 = vmul.f32 %v639, %v322
        %v642 = vmul.f32 %v637, %v326
        %v643 = vmul.f32 %v640, %v322
        %v644 = vmul.f32 %v638, %v326
        %645 = vst [vmem:[#allocation2 + $0x40] sm:$0xff] %v641
        %646 = vst [vmem:[#allocation2 + $0x48] sm:$0xff] %v642
        %647 = vst [vmem:[#allocation2 + $0x50] sm:$0xff] %v643
        %648 = vst [vmem:[#allocation2 + $0x58] sm:$0xff] %v644
        %649 = vrot.lane.b32.xlu0 %v580, 1
        %v650 = vpop.permute.xlu0 %649
        %651 = vrot.lane.b32.xlu0 %v582, 1
        %v652 = vpop.permute.xlu0 %651
        %653 = vrot.lane.b32.xlu0 %v581, 1
        %v654 = vpop.permute.xlu0 %653
        %655 = vrot.lane.b32.xlu0 %v583, 1
        %v656 = vpop.permute.xlu0 %655
        %vm657 = vcmp.lt.s32.totalorder %v593, 1
        %v658 = vsel %vm657, %v650, %v654
        %v659 = vsel %vm657, %v652, %v656
        %v660 = vsel %vm657, %v654, %v650
        %v661 = vsel %vm657, %v656, %v652
        %v662 = vmul.f32 %v660, %v330
        %v663 = vmul.f32 %v658, %v334
        %v664 = vmul.f32 %v661, %v330
        %v665 = vmul.f32 %v659, %v334
        %666 = vst [vmem:[#allocation2 + $0x60] sm:$0xff] %v662
        %667 = vst [vmem:[#allocation2 + $0x68] sm:$0xff] %v663
        %668 = vst [vmem:[#allocation2 + $0x70] sm:$0xff] %v664
        %669 = vst [vmem:[#allocation2 + $0x78] sm:$0xff] %v665
        %670 = vst [vmem:[#allocation2 + $0x80] sm:$0xff] %v580
        %671 = vst [vmem:[#allocation2 + $0x88] sm:$0xff] %v581
        %672 = vst [vmem:[#allocation2 + $0x90] sm:$0xff] %v582
        %673 = vst [vmem:[#allocation2 + $0x98] sm:$0xff] %v583
        %674 = vrot.lane.b32.xlu0 %v580, 127
        %v675 = vpop.permute.xlu0 %674
        %676 = vrot.lane.b32.xlu0 %v582, 127
        %v677 = vpop.permute.xlu0 %676
        %678 = vrot.lane.b32.xlu0 %v581, 127
        %v679 = vpop.permute.xlu0 %678
        %680 = vrot.lane.b32.xlu0 %v583, 127
        %v681 = vpop.permute.xlu0 %680
        %vm682 = vcmp.lt.s32.totalorder %v593, 127
        %v683 = vsel %vm682, %v675, %v679
        %v684 = vsel %vm682, %v677, %v681
        %v685 = vsel %vm682, %v679, %v675
        %v686 = vsel %vm682, %v681, %v677
        %v687 = vmul.f32 %v683, %v338
        %v688 = vmul.f32 %v685, %v342
        %v689 = vmul.f32 %v684, %v338
        %v690 = vmul.f32 %v686, %v342
        %691 = vst [vmem:[#allocation2 + $0xa0] sm:$0xff] %v687
        %692 = vst [vmem:[#allocation2 + $0xa8] sm:$0xff] %v688
        %693 = vst [vmem:[#allocation2 + $0xb0] sm:$0xff] %v689
        %694 = vst [vmem:[#allocation2 + $0xb8] sm:$0xff] %v690
        %695 = vrot.lane.b32.xlu0 %v580, 113
        %v696 = vpop.permute.xlu0 %695
        %697 = vrot.lane.b32.xlu0 %v582, 113
        %v698 = vpop.permute.xlu0 %697
        %699 = vrot.lane.b32.xlu0 %v581, 113
        %v700 = vpop.permute.xlu0 %699
        %701 = vrot.lane.b32.xlu0 %v583, 113
        %v702 = vpop.permute.xlu0 %701
        %vm703 = vcmp.lt.s32.totalorder %v593, 113
        %v704 = vsel %vm703, %v696, %v700
        %v705 = vsel %vm703, %v698, %v702
        %v706 = vsel %vm703, %v700, %v696
        %v707 = vsel %vm703, %v702, %v698
        %v708 = vmul.f32 %v704, %v346
        %v709 = vmul.f32 %v706, %v350
        %v710 = vmul.f32 %v705, %v346
        %v711 = vmul.f32 %v707, %v350
        %712 = vst [vmem:[#allocation2 + $0xc0] sm:$0xff] %v708
        %713 = vst [vmem:[#allocation2 + $0xc8] sm:$0xff] %v709
        %714 = vst [vmem:[#allocation2 + $0xd0] sm:$0xff] %v710
        %715 = vst [vmem:[#allocation2 + $0xd8] sm:$0xff] %v711
        %716 = vrot.lane.b32.xlu0 %v580, 112
        %v717 = vpop.permute.xlu0 %716
        %718 = vrot.lane.b32.xlu0 %v582, 112
        %v719 = vpop.permute.xlu0 %718
        %720 = vrot.lane.b32.xlu0 %v581, 112
        %v721 = vpop.permute.xlu0 %720
        %722 = vrot.lane.b32.xlu0 %v583, 112
        %v723 = vpop.permute.xlu0 %722
        %vm724 = vcmp.lt.s32.totalorder %v593, 112
        %v725 = vsel %vm724, %v717, %v721
        %v726 = vsel %vm724, %v719, %v723
        %v727 = vsel %vm724, %v721, %v717
        %v728 = vsel %vm724, %v723, %v719
        %v729 = vmul.f32 %v725, %v354
        %v730 = vmul.f32 %v727, %v358
        %v731 = vmul.f32 %v726, %v354
        %v732 = vmul.f32 %v728, %v358
        %733 = vst [vmem:[#allocation2 + $0xe0] sm:$0xff] %v729
        %734 = vst [vmem:[#allocation2 + $0xe8] sm:$0xff] %v730
        %735 = vst [vmem:[#allocation2 + $0xf0] sm:$0xff] %v731
        %736 = vst [vmem:[#allocation2 + $0xf8] sm:$0xff] %v732
        %737 = vrot.lane.b32.xlu0 %v580, 111
        %v738 = vpop.permute.xlu0 %737
        %739 = vrot.lane.b32.xlu0 %v582, 111
        %v740 = vpop.permute.xlu0 %739
        %741 = vrot.lane.b32.xlu0 %v581, 111
        %v742 = vpop.permute.xlu0 %741
        %743 = vrot.lane.b32.xlu0 %v583, 111
        %v744 = vpop.permute.xlu0 %743
        %vm745 = vcmp.lt.s32.totalorder %v593, 111
        %v746 = vsel %vm745, %v738, %v742
        %v747 = vsel %vm745, %v740, %v744
        %v748 = vsel %vm745, %v742, %v738
        %v749 = vsel %vm745, %v744, %v740
        %v750 = vmul.f32 %v746, %v362
        %v751 = vmul.f32 %v748, %v366
        %v752 = vmul.f32 %v747, %v362
        %v753 = vmul.f32 %v749, %v366
        %754 = vst [vmem:[#allocation2 + $0x100] sm:$0xff] %v750
        %755 = vst [vmem:[#allocation2 + $0x108] sm:$0xff] %v751
        %756 = vst [vmem:[#allocation2 + $0x110] sm:$0xff] %v752
        %757 = vst [vmem:[#allocation2 + $0x118] sm:$0xff] %v753
        %v758 = vld [vmem:[#allocation6] sm:$0xff]
        %v759 = vld [vmem:[#allocation6 + $0x8] sm:$0xff]
        %v760 = vld [vmem:[#allocation6 + $0x10] sm:$0xff]
        %v761 = vld [vmem:[#allocation6 + $0x18] sm:$0xff]
        %v762 = vld [vmem:[#allocation2] sm:$0xff]
        %v763 = vld [vmem:[#allocation2 + $0x8] sm:$0xff]
        %v764 = vld [vmem:[#allocation2 + $0x10] sm:$0xff]
        %v765 = vld [vmem:[#allocation2 + $0x18] sm:$0xff]
        %v766 = vld [vmem:[#allocation2 + $0x20] sm:$0xff]
        %v767 = vld [vmem:[#allocation2 + $0x28] sm:$0xff]
        %v768 = vld [vmem:[#allocation2 + $0x30] sm:$0xff]
        %v769 = vld [vmem:[#allocation2 + $0x38] sm:$0xff]
        %v770 = vld [vmem:[#allocation2 + $0x40] sm:$0xff]
        %v771 = vld [vmem:[#allocation2 + $0x48] sm:$0xff]
        %v772 = vld [vmem:[#allocation2 + $0x50] sm:$0xff]
        %v773 = vld [vmem:[#allocation2 + $0x58] sm:$0xff]
        %v774 = vld [vmem:[#allocation2 + $0x60] sm:$0xff]
        %v775 = vld [vmem:[#allocation2 + $0x68] sm:$0xff]
        %v776 = vld [vmem:[#allocation2 + $0x70] sm:$0xff]
        %v777 = vld [vmem:[#allocation2 + $0x78] sm:$0xff]
        %v778 = vld [vmem:[#allocation2 + $0x80] sm:$0xff]
        %v779 = vld [vmem:[#allocation2 + $0x88] sm:$0xff]
        %v780 = vld [vmem:[#allocation2 + $0x90] sm:$0xff]
        %v781 = vld [vmem:[#allocation2 + $0x98] sm:$0xff]
        %v782 = vld [vmem:[#allocation2 + $0xa0] sm:$0xff]
        %v783 = vld [vmem:[#allocation2 + $0xa8] sm:$0xff]
        %v784 = vld [vmem:[#allocation2 + $0xb0] sm:$0xff]
        %v785 = vld [vmem:[#allocation2 + $0xb8] sm:$0xff]
        %v786 = vld [vmem:[#allocation2 + $0xc0] sm:$0xff]
        %v787 = vld [vmem:[#allocation2 + $0xc8] sm:$0xff]
        %v788 = vld [vmem:[#allocation2 + $0xd0] sm:$0xff]
        %v789 = vld [vmem:[#allocation2 + $0xd8] sm:$0xff]
        %v790 = vld [vmem:[#allocation2 + $0xe0] sm:$0xff]
        %v791 = vld [vmem:[#allocation2 + $0xe8] sm:$0xff]
        %v792 = vld [vmem:[#allocation2 + $0xf0] sm:$0xff]
        %v793 = vld [vmem:[#allocation2 + $0xf8] sm:$0xff]
        %v794 = vld [vmem:[#allocation2 + $0x100] sm:$0xff]
        %v795 = vld [vmem:[#allocation2 + $0x108] sm:$0xff]
        %v796 = vld [vmem:[#allocation2 + $0x110] sm:$0xff]
        %v797 = vld [vmem:[#allocation2 + $0x118] sm:$0xff]
        %v799 = vsel %vm387, %v759, 0
        %v802 = vsel %vm387, %v761, 0
        %804 = vmatprep.subr.mxu0 %v763
        %805 = vmatpush1.msra.mxu0 %v762
        %806 = vmatprep.subr.mxu0 %v765
        %807 = vmatpush1.msra.mxu0 %v764
        %808 = vmatprep.subr.mxu0 %v767
        %809 = vmatpush1.msra.mxu0 %v766
        %810 = vmatprep.subr.mxu0 %v769
        %811 = vmatpush1.msra.mxu0 %v768
        %812 = vmatprep.subr.mxu0 %v771
        %813 = vmatpush1.msra.mxu0 %v770
        %814 = vmatprep.subr.mxu0 %v773
        %815 = vmatpush1.msra.mxu0 %v772
        %816 = vmatprep.subr.mxu0 %v775
        %817 = vmatpush1.msra.mxu0 %v774
        %818 = vmatprep.subr.mxu0 %v777
        %819 = vmatpush1.msra.mxu0 %v776
        %820 = vmatprep.subr.mxu0 %v779
        %821 = vmatpush1.msra.mxu0 %v778
        %822 = vmatprep.subr.mxu0 %v781
        %823 = vmatpush1.msra.mxu0 %v780
        %824 = vmatprep.subr.mxu0 %v783
        %825 = vmatpush1.msra.mxu0 %v782
        %826 = vmatprep.subr.mxu0 %v785
        %827 = vmatpush1.msra.mxu0 %v784
        %828 = vmatprep.subr.mxu0 %v787
        %829 = vmatpush1.msra.mxu0 %v786
        %830 = vmatprep.subr.mxu0 %v789
        %831 = vmatpush1.msra.mxu0 %v788
        %832 = vmatprep.subr.mxu0 %v791
        %833 = vmatpush1.msra.mxu0 %v790
        %834 = vmatprep.subr.mxu0 %v793
        %835 = vmatpush1.msra.mxu0 %v792
        %836 = vmatprep.subr.mxu0 %v795
        %837 = vmatpush1.msra.mxu0 %v794
        %838 = vmatprep.subr.mxu0 %v797
        %839 = vmatpush1.msra.mxu0 %v796
        %840 = vmatprep.subr.mxu0 0.0
        %841 = vmatpush1.msra.mxu0 0.0
        %842 = vmatprep.subr.mxu0 0.0
        %843 = vmatpush1.msra.mxu0 0.0
        %844 = vmatprep.subr.mxu0 0.0
        %845 = vmatpush1.msra.mxu0 0.0
        %846 = vmatprep.subr.mxu0 0.0
        %847 = vmatpush1.msra.mxu0 0.0
        %848 = vmatprep.subr.mxu0 0.0
        %849 = vmatpush1.msra.mxu0 0.0
        %850 = vmatprep.subr.mxu0 0.0
        %851 = vmatpush1.msra.mxu0 0.0
        %852 = vmatprep.subr.mxu0 0.0
        %853 = vmatpush1.msra.mxu0 0.0
        %854 = vmatprep.subr.mxu0 0.0
        %855 = vmatpush1.msra.mxu0 0.0
        %856 = vmatprep.subr.mxu0 0.0
        %857 = vmatpush1.msra.mxu0 0.0
        %858 = vmatprep.subr.mxu0 0.0
        %859 = vmatpush1.msra.mxu0 0.0
        %860 = vmatprep.subr.mxu0 0.0
        %861 = vmatpush1.msra.mxu0 0.0
        %862 = vmatprep.subr.mxu0 0.0
        %863 = vmatpush1.msra.mxu0 0.0
        %864 = vmatprep.subr.mxu0 0.0
        %865 = vmatpush1.msra.mxu0 0.0
        %866 = vmatprep.subr.mxu0 0.0
        %867 = vmatpush1.msra.mxu0 0.0
        %868 = vmatprep.mubr.f32.mxu0 %v799
        %869 = vmatmul.mubr.f32.gmra.mrb[0].mxu0 %v758
        %v870 = vpop.f32.mrb[0].mxu0
        %v871 = vadd.f32 0.0, %v870
        %v872 = vpop.f32.mrb[0].mxu0
        %v873 = vadd.f32 0.0, %v872
        %874 = vmatprep.mubr.f32.mxu0 %v802
        %875 = vmatmul.mubr.f32.gmra.mrb[0].mxu0 %v760
        %v876 = vpop.f32.mrb[0].mxu0
        %v877 = vadd.f32 0.0, %v876
        %v878 = vpop.f32.mrb[0].mxu0
        %v879 = vadd.f32 0.0, %v878
        %880 = vdwg.mxu0
        %v881 = vadd.f32 %v871, %v873
        %882 = vadd.xlane.f32.xlu0 %v881
        %v883 = vpop.xlane.xlu0 %882
        %v884 = vadd.f32 %v877, %v879
        %885 = vadd.xlane.f32.xlu0 %v884
        %v886 = vpop.xlane.xlu0 %885
        %v887 = vmul.f32 %v871, %v871
        %v888 = vmul.f32 %v873, %v873
        %v889 = vmul.f32 %v877, %v877
        %v890 = vmul.f32 %v879, %v879
        %v891 = vadd.f32 %v887, %v888
        %892 = vadd.xlane.f32.xlu0 %v891
        %v893 = vpop.xlane.xlu0 %892
        %v894 = vadd.f32 %v889, %v890
        %895 = vadd.xlane.f32.xlu0 %v894
        %v896 = vpop.xlane.xlu0 %895
        %897 = vmatprep.subr.mxu0 0.0
        %898 = vmatpush1.msra.mxu0 %v883
        %899 = vmatprep.subr.mxu0 0.0
        %900 = vmatpush1.msra.mxu0 %v886
        %901 = vmatprep.subr.mxu0 0.0
        %902 = vmatpush1.msra.mxu0 0.0
        %903 = vmatprep.subr.mxu0 0.0
        %904 = vmatpush1.msra.mxu0 0.0
        %905 = vmatprep.subr.mxu0 0.0
        %906 = vmatpush1.msra.mxu0 0.0
        %907 = vmatprep.subr.mxu0 0.0
        %908 = vmatpush1.msra.mxu0 0.0
        %909 = vmatprep.subr.mxu0 0.0
        %910 = vmatpush1.msra.mxu0 0.0
        %911 = vmatprep.subr.mxu0 0.0
        %912 = vmatpush1.msra.mxu0 0.0
        %913 = vmatprep.subr.mxu0 0.0
        %914 = vmatpush1.msra.mxu0 0.0
        %915 = vmatprep.subr.mxu0 0.0
        %916 = vmatpush1.msra.mxu0 0.0
        %917 = vmatprep.subr.mxu0 0.0
        %918 = vmatpush1.msra.mxu0 0.0
        %919 = vmatprep.subr.mxu0 0.0
        %920 = vmatpush1.msra.mxu0 0.0
        %921 = vmatprep.subr.mxu0 0.0
        %922 = vmatpush1.msra.mxu0 0.0
        %923 = vmatprep.subr.mxu0 0.0
        %924 = vmatpush1.msra.mxu0 0.0
        %925 = vmatprep.subr.mxu0 0.0
        %926 = vmatpush1.msra.mxu0 0.0
        %927 = vmatprep.subr.mxu0 0.0
        %928 = vmatpush1.msra.mxu0 0.0
        %929 = vmatprep.subr.mxu0 0.0
        %930 = vmatpush1.msra.mxu0 0.0
        %931 = vmatprep.subr.mxu0 0.0
        %932 = vmatpush1.msra.mxu0 0.0
        %933 = vmatprep.subr.mxu0 0.0
        %934 = vmatpush1.msra.mxu0 0.0
        %935 = vmatprep.subr.mxu0 0.0
        %936 = vmatpush1.msra.mxu0 0.0
        %937 = vmatprep.subr.mxu0 0.0
        %938 = vmatpush1.msra.mxu0 0.0
        %939 = vmatprep.subr.mxu0 0.0
        %940 = vmatpush1.msra.mxu0 0.0
        %941 = vmatprep.subr.mxu0 0.0
        %942 = vmatpush1.msra.mxu0 0.0
        %943 = vmatprep.subr.mxu0 0.0
        %944 = vmatpush1.msra.mxu0 0.0
        %945 = vmatprep.subr.mxu0 0.0
        %946 = vmatpush1.msra.mxu0 0.0
        %947 = vmatprep.subr.mxu0 0.0
        %948 = vmatpush1.msra.mxu0 0.0
        %949 = vmatprep.subr.mxu0 0.0
        %950 = vmatpush1.msra.mxu0 0.0
        %951 = vmatprep.subr.mxu0 0.0
        %952 = vmatpush1.msra.mxu0 0.0
        %953 = vmatprep.subr.mxu0 0.0
        %954 = vmatpush1.msra.mxu0 0.0
        %955 = vmatprep.subr.mxu0 0.0
        %956 = vmatpush1.msra.mxu0 0.0
        %957 = vmatprep.subr.mxu0 0.0
        %958 = vmatpush1.msra.mxu0 0.0
        %959 = vmatprep.subr.mxu0 0.0
        %960 = vmatpush1.msra.mxu0 0.0
        %961 = vmatprep.mubr.f32.mxu0 0.0
        %962 = vmatmul.mubr.f32.gmra.mrb[0].mxu0 %v389
        %v963 = vpop.f32.mrb[0].mxu0
        %v964 = vadd.f32 0.0, %v963
        %v965 = vpop.f32.mrb[0].mxu0
        %966 = vmatprep.mubr.f32.mxu0 0.0
        %967 = vmatmul.mubr.f32.gmra.mrb[0].mxu0 %v392
        %v968 = vpop.f32.mrb[0].mxu0
        %v969 = vadd.f32 0.0, %v968
        %v970 = vpop.f32.mrb[0].mxu0
        %971 = vdwg.mxu0
        %972 = vmatprep.subr.mxu0 0.0
        %973 = vmatpush1.msra.mxu0 %v893
        %974 = vmatprep.subr.mxu0 0.0
        %975 = vmatpush1.msra.mxu0 %v896
        %976 = vmatprep.subr.mxu0 0.0
        %977 = vmatpush1.msra.mxu0 0.0
        %978 = vmatprep.subr.mxu0 0.0
        %979 = vmatpush1.msra.mxu0 0.0
        %980 = vmatprep.subr.mxu0 0.0
        %981 = vmatpush1.msra.mxu0 0.0
        %982 = vmatprep.subr.mxu0 0.0
        %983 = vmatpush1.msra.mxu0 0.0
        %984 = vmatprep.subr.mxu0 0.0
        %985 = vmatpush1.msra.mxu0 0.0
        %986 = vmatprep.subr.mxu0 0.0
        %987 = vmatpush1.msra.mxu0 0.0
        %988 = vmatprep.subr.mxu0 0.0
        %989 = vmatpush1.msra.mxu0 0.0
        %990 = vmatprep.subr.mxu0 0.0
        %991 = vmatpush1.msra.mxu0 0.0
        %992 = vmatprep.subr.mxu0 0.0
        %993 = vmatpush1.msra.mxu0 0.0
        %994 = vmatprep.subr.mxu0 0.0
        %995 = vmatpush1.msra.mxu0 0.0
        %996 = vmatprep.subr.mxu0 0.0
        %997 = vmatpush1.msra.mxu0 0.0
        %998 = vmatprep.subr.mxu0 0.0
        %999 = vmatpush1.msra.mxu0 0.0
        %1000 = vmatprep.subr.mxu0 0.0
        %1001 = vmatpush1.msra.mxu0 0.0
        %1002 = vmatprep.subr.mxu0 0.0
        %1003 = vmatpush1.msra.mxu0 0.0
        %1004 = vmatprep.subr.mxu0 0.0
        %1005 = vmatpush1.msra.mxu0 0.0
        %1006 = vmatprep.subr.mxu0 0.0
        %1007 = vmatpush1.msra.mxu0 0.0
        %1008 = vmatprep.subr.mxu0 0.0
        %1009 = vmatpush1.msra.mxu0 0.0
        %1010 = vmatprep.subr.mxu0 0.0
        %1011 = vmatpush1.msra.mxu0 0.0
        %1012 = vmatprep.subr.mxu0 0.0
        %1013 = vmatpush1.msra.mxu0 0.0
        %1014 = vmatprep.subr.mxu0 0.0
        %1015 = vmatpush1.msra.mxu0 0.0
        %1016 = vmatprep.subr.mxu0 0.0
        %1017 = vmatpush1.msra.mxu0 0.0
        %1018 = vmatprep.subr.mxu0 0.0
        %1019 = vmatpush1.msra.mxu0 0.0
        %1020 = vmatprep.subr.mxu0 0.0
        %1021 = vmatpush1.msra.mxu0 0.0
        %1022 = vmatprep.subr.mxu0 0.0
        %1023 = vmatpush1.msra.mxu0 0.0
        %1024 = vmatprep.subr.mxu0 0.0
        %1025 = vmatpush1.msra.mxu0 0.0
        %1026 = vmatprep.subr.mxu0 0.0
        %1027 = vmatpush1.msra.mxu0 0.0
        %1028 = vmatprep.subr.mxu0 0.0
        %1029 = vmatpush1.msra.mxu0 0.0
        %1030 = vmatprep.subr.mxu0 0.0
        %1031 = vmatpush1.msra.mxu0 0.0
        %1032 = vmatprep.subr.mxu0 0.0
        %1033 = vmatpush1.msra.mxu0 0.0
        %1034 = vmatprep.subr.mxu0 0.0
        %1035 = vmatpush1.msra.mxu0 0.0
        %1036 = vmatprep.mubr.f32.mxu0 0.0
        %1037 = vmatmul.mubr.f32.gmra.mrb[0].mxu0 %v389
        %v1038 = vpop.f32.mrb[0].mxu0
        %v1039 = vadd.f32 0.0, %v1038
        %v1040 = vpop.f32.mrb[0].mxu0
        %1041 = vmatprep.mubr.f32.mxu0 0.0
        %1042 = vmatmul.mubr.f32.gmra.mrb[0].mxu0 %v392
        %v1043 = vpop.f32.mrb[0].mxu0
        %v1044 = vadd.f32 0.0, %v1043
        %v1045 = vpop.f32.mrb[0].mxu0
        %1046 = vdwg.mxu0
        %v1047 = vmul.f32 %v964, %v964
        %v1048 = vmul.f32 %v969, %v969
        %v1049 = vsub.f32 %v1039, %v1047
        %v1050 = vsub.f32 %v1044, %v1048
        %1052 = vset.pattern.permute.xlu0 0
        %1053 = vperm.xlu0 %1052, %v964
        %v1054 = vpop.permute.xlu0 %1053
        %1057 = vset.pattern.permute.xlu0 0
        %1058 = vperm.xlu0 %1057, %v969
        %v1059 = vpop.permute.xlu0 %1058
        %v1061 = vsub.f32 %v871, %v1054
        %v1062 = vsub.f32 %v873, %v1054
        %v1063 = vsub.f32 %v877, %v1059
        %v1064 = vsub.f32 %v879, %v1059
        %v1065 = vadd.f32 %v1049, 1e-05
        %v1066 = vadd.f32 %v1050, 1e-05
        %v1067 = vrsqrt.pop %v1065
        %v1068 = vrsqrt.pop %v1066
        %1070 = vset.pattern.permute.xlu0 0
        %1071 = vperm.xlu0 %1070, %v1067
        %v1072 = vpop.permute.xlu0 %1071
        %1075 = vset.pattern.permute.xlu0 0
        %1076 = vperm.xlu0 %1075, %v1068
        %v1077 = vpop.permute.xlu0 %1076
        %v1079 = vmul.f32 %v1061, %v1072
        %v1080 = vmul.f32 %v1062, %v1072
        %v1081 = vmul.f32 %v1063, %v1077
        %v1082 = vmul.f32 %v1064, %v1077
        %v1083 = vmax.f32 %v1079, 0.0
        %v1084 = vmax.f32 %v1080, 0.0
        %v1085 = vmax.f32 %v1081, 0.0
        %v1086 = vmax.f32 %v1082, 0.0
        %1087 = vrot.lane.b32.xlu0 %v1083, 17
        %v1088 = vpop.permute.xlu0 %1087
        %1089 = vrot.lane.b32.xlu0 %v1085, 17
        %v1090 = vpop.permute.xlu0 %1089
        %1091 = vrot.lane.b32.xlu0 %v1084, 17
        %v1092 = vpop.permute.xlu0 %1091
        %1093 = vrot.lane.b32.xlu0 %v1086, 17
        %v1094 = vpop.permute.xlu0 %1093
        %v1095 = vsel %vm594, %v1088, %v1092
        %v1096 = vsel %vm594, %v1090, %v1094
        %v1097 = vsel %vm594, %v1092, %v1088
        %v1098 = vsel %vm594, %v1094, %v1090
        %v1099 = vmul.f32 %v1097, %v306
        %v1100 = vmul.f32 %v1095, %v310
        %v1101 = vmul.f32 %v1098, %v306
        %v1102 = vmul.f32 %v1096, %v310
        %1103 = vst [vmem:[#allocation2] sm:$0xff] %v1099
        %1104 = vst [vmem:[#allocation2 + $0x8] sm:$0xff] %v1100
        %1105 = vst [vmem:[#allocation2 + $0x10] sm:$0xff] %v1101
        %1106 = vst [vmem:[#allocation2 + $0x18] sm:$0xff] %v1102
        %1107 = vrot.lane.b32.xlu0 %v1083, 16
        %v1108 = vpop.permute.xlu0 %1107
        %1109 = vrot.lane.b32.xlu0 %v1085, 16
        %v1110 = vpop.permute.xlu0 %1109
        %1111 = vrot.lane.b32.xlu0 %v1084, 16
        %v1112 = vpop.permute.xlu0 %1111
        %1113 = vrot.lane.b32.xlu0 %v1086, 16
        %v1114 = vpop.permute.xlu0 %1113
        %v1115 = vsel %vm615, %v1108, %v1112
        %v1116 = vsel %vm615, %v1110, %v1114
        %v1117 = vsel %vm615, %v1112, %v1108
        %v1118 = vsel %vm615, %v1114, %v1110
        %v1119 = vmul.f32 %v1117, %v314
        %v1120 = vmul.f32 %v1115, %v318
        %v1121 = vmul.f32 %v1118, %v314
        %v1122 = vmul.f32 %v1116, %v318
        %1123 = vst [vmem:[#allocation2 + $0x20] sm:$0xff] %v1119
        %1124 = vst [vmem:[#allocation2 + $0x28] sm:$0xff] %v1120
        %1125 = vst [vmem:[#allocation2 + $0x30] sm:$0xff] %v1121
        %1126 = vst [vmem:[#allocation2 + $0x38] sm:$0xff] %v1122
        %1127 = vrot.lane.b32.xlu0 %v1083, 15
        %v1128 = vpop.permute.xlu0 %1127
        %1129 = vrot.lane.b32.xlu0 %v1085, 15
        %v1130 = vpop.permute.xlu0 %1129
        %1131 = vrot.lane.b32.xlu0 %v1084, 15
        %v1132 = vpop.permute.xlu0 %1131
        %1133 = vrot.lane.b32.xlu0 %v1086, 15
        %v1134 = vpop.permute.xlu0 %1133
        %v1135 = vsel %vm636, %v1128, %v1132
        %v1136 = vsel %vm636, %v1130, %v1134
        %v1137 = vsel %vm636, %v1132, %v1128
        %v1138 = vsel %vm636, %v1134, %v1130
        %v1139 = vmul.f32 %v1137, %v322
        %v1140 = vmul.f32 %v1135, %v326
        %v1141 = vmul.f32 %v1138, %v322
        %v1142 = vmul.f32 %v1136, %v326
        %1143 = vst [vmem:[#allocation2 + $0x40] sm:$0xff] %v1139
        %1144 = vst [vmem:[#allocation2 + $0x48] sm:$0xff] %v1140
        %1145 = vst [vmem:[#allocation2 + $0x50] sm:$0xff] %v1141
        %1146 = vst [vmem:[#allocation2 + $0x58] sm:$0xff] %v1142
        %1147 = vrot.lane.b32.xlu0 %v1083, 1
        %v1148 = vpop.permute.xlu0 %1147
        %1149 = vrot.lane.b32.xlu0 %v1085, 1
        %v1150 = vpop.permute.xlu0 %1149
        %1151 = vrot.lane.b32.xlu0 %v1084, 1
        %v1152 = vpop.permute.xlu0 %1151
        %1153 = vrot.lane.b32.xlu0 %v1086, 1
        %v1154 = vpop.permute.xlu0 %1153
        %v1155 = vsel %vm657, %v1148, %v1152
        %v1156 = vsel %vm657, %v1150, %v1154
        %v1157 = vsel %vm657, %v1152, %v1148
        %v1158 = vsel %vm657, %v1154, %v1150
        %v1159 = vmul.f32 %v1157, %v330
        %v1160 = vmul.f32 %v1155, %v334
        %v1161 = vmul.f32 %v1158, %v330
        %v1162 = vmul.f32 %v1156, %v334
        %1163 = vst [vmem:[#allocation2 + $0x60] sm:$0xff] %v1159
        %1164 = vst [vmem:[#allocation2 + $0x68] sm:$0xff] %v1160
        %1165 = vst [vmem:[#allocation2 + $0x70] sm:$0xff] %v1161
        %1166 = vst [vmem:[#allocation2 + $0x78] sm:$0xff] %v1162
        %1167 = vst [vmem:[#allocation2 + $0x80] sm:$0xff] %v1083
        %1168 = vst [vmem:[#allocation2 + $0x88] sm:$0xff] %v1084
        %1169 = vst [vmem:[#allocation2 + $0x90] sm:$0xff] %v1085
        %1170 = vst [vmem:[#allocation2 + $0x98] sm:$0xff] %v1086
        %1171 = vrot.lane.b32.xlu0 %v1083, 127
        %v1172 = vpop.permute.xlu0 %1171
        %1173 = vrot.lane.b32.xlu0 %v1085, 127
        %v1174 = vpop.permute.xlu0 %1173
        %1175 = vrot.lane.b32.xlu0 %v1084, 127
        %v1176 = vpop.permute.xlu0 %1175
        %1177 = vrot.lane.b32.xlu0 %v1086, 127
        %v1178 = vpop.permute.xlu0 %1177
        %v1179 = vsel %vm682, %v1172, %v1176
        %v1180 = vsel %vm682, %v1174, %v1178
        %v1181 = vsel %vm682, %v1176, %v1172
        %v1182 = vsel %vm682, %v1178, %v1174
        %v1183 = vmul.f32 %v1179, %v338
        %v1184 = vmul.f32 %v1181, %v342
        %v1185 = vmul.f32 %v1180, %v338
        %v1186 = vmul.f32 %v1182, %v342
        %1187 = vst [vmem:[#allocation2 + $0xa0] sm:$0xff] %v1183
        %1188 = vst [vmem:[#allocation2 + $0xa8] sm:$0xff] %v1184
        %1189 = vst [vmem:[#allocation2 + $0xb0] sm:$0xff] %v1185
        %1190 = vst [vmem:[#allocation2 + $0xb8] sm:$0xff] %v1186
        %1191 = vrot.lane.b32.xlu0 %v1083, 113
        %v1192 = vpop.permute.xlu0 %1191
        %1193 = vrot.lane.b32.xlu0 %v1085, 113
        %v1194 = vpop.permute.xlu0 %1193
        %1195 = vrot.lane.b32.xlu0 %v1084, 113
        %v1196 = vpop.permute.xlu0 %1195
        %1197 = vrot.lane.b32.xlu0 %v1086, 113
        %v1198 = vpop.permute.xlu0 %1197
        %v1199 = vsel %vm703, %v1192, %v1196
        %v1200 = vsel %vm703, %v1194, %v1198
        %v1201 = vsel %vm703, %v1196, %v1192
        %v1202 = vsel %vm703, %v1198, %v1194
        %v1203 = vmul.f32 %v1199, %v346
        %v1204 = vmul.f32 %v1201, %v350
        %v1205 = vmul.f32 %v1200, %v346
        %v1206 = vmul.f32 %v1202, %v350
        %1207 = vst [vmem:[#allocation2 + $0xc0] sm:$0xff] %v1203
        %1208 = vst [vmem:[#allocation2 + $0xc8] sm:$0xff] %v1204
        %1209 = vst [vmem:[#allocation2 + $0xd0] sm:$0xff] %v1205
        %1210 = vst [vmem:[#allocation2 + $0xd8] sm:$0xff] %v1206
        %1211 = vrot.lane.b32.xlu0 %v1083, 112
        %v1212 = vpop.permute.xlu0 %1211
        %1213 = vrot.lane.b32.xlu0 %v1085, 112
        %v1214 = vpop.permute.xlu0 %1213
        %1215 = vrot.lane.b32.xlu0 %v1084, 112
        %v1216 = vpop.permute.xlu0 %1215
        %1217 = vrot.lane.b32.xlu0 %v1086, 112
        %v1218 = vpop.permute.xlu0 %1217
        %v1219 = vsel %vm724, %v1212, %v1216
        %v1220 = vsel %vm724, %v1214, %v1218
        %v1221 = vsel %vm724, %v1216, %v1212
        %v1222 = vsel %vm724, %v1218, %v1214
        %v1223 = vmul.f32 %v1219, %v354
        %v1224 = vmul.f32 %v1221, %v358
        %v1225 = vmul.f32 %v1220, %v354
        %v1226 = vmul.f32 %v1222, %v358
        %1227 = vst [vmem:[#allocation2 + $0xe0] sm:$0xff] %v1223
        %1228 = vst [vmem:[#allocation2 + $0xe8] sm:$0xff] %v1224
        %1229 = vst [vmem:[#allocation2 + $0xf0] sm:$0xff] %v1225
        %1230 = vst [vmem:[#allocation2 + $0xf8] sm:$0xff] %v1226
        %1231 = vrot.lane.b32.xlu0 %v1083, 111
        %v1232 = vpop.permute.xlu0 %1231
        %1233 = vrot.lane.b32.xlu0 %v1085, 111
        %v1234 = vpop.permute.xlu0 %1233
        %1235 = vrot.lane.b32.xlu0 %v1084, 111
        %v1236 = vpop.permute.xlu0 %1235
        %1237 = vrot.lane.b32.xlu0 %v1086, 111
        %v1238 = vpop.permute.xlu0 %1237
        %v1239 = vsel %vm745, %v1232, %v1236
        %v1240 = vsel %vm745, %v1234, %v1238
        %v1241 = vsel %vm745, %v1236, %v1232
        %v1242 = vsel %vm745, %v1238, %v1234
        %v1243 = vmul.f32 %v1239, %v362
        %v1244 = vmul.f32 %v1241, %v366
        %v1245 = vmul.f32 %v1240, %v362
        %v1246 = vmul.f32 %v1242, %v366
        %1247 = vst [vmem:[#allocation2 + $0x100] sm:$0xff] %v1243
        %1248 = vst [vmem:[#allocation2 + $0x108] sm:$0xff] %v1244
        %1249 = vst [vmem:[#allocation2 + $0x110] sm:$0xff] %v1245
        %1250 = vst [vmem:[#allocation2 + $0x118] sm:$0xff] %v1246
        %v1251 = vld [vmem:[#allocation8] sm:$0xff]
        %v1252 = vld [vmem:[#allocation8 + $0x8] sm:$0xff]
        %v1253 = vld [vmem:[#allocation8 + $0x10] sm:$0xff]
        %v1254 = vld [vmem:[#allocation8 + $0x18] sm:$0xff]
        %v1255 = vld [vmem:[#allocation2] sm:$0xff]
        %v1256 = vld [vmem:[#allocation2 + $0x8] sm:$0xff]
        %v1257 = vld [vmem:[#allocation2 + $0x10] sm:$0xff]
        %v1258 = vld [vmem:[#allocation2 + $0x18] sm:$0xff]
        %v1259 = vld [vmem:[#allocation2 + $0x20] sm:$0xff]
        %v1260 = vld [vmem:[#allocation2 + $0x28] sm:$0xff]
        %v1261 = vld [vmem:[#allocation2 + $0x30] sm:$0xff]
        %v1262 = vld [vmem:[#allocation2 + $0x38] sm:$0xff]
        %v1263 = vld [vmem:[#allocation2 + $0x40] sm:$0xff]
        %v1264 = vld [vmem:[#allocation2 + $0x48] sm:$0xff]
        %v1265 = vld [vmem:[#allocation2 + $0x50] sm:$0xff]
        %v1266 = vld [vmem:[#allocation2 + $0x58] sm:$0xff]
        %v1267 = vld [vmem:[#allocation2 + $0x60] sm:$0xff]
        %v1268 = vld [vmem:[#allocation2 + $0x68] sm:$0xff]
        %v1269 = vld [vmem:[#allocation2 + $0x70] sm:$0xff]
        %v1270 = vld [vmem:[#allocation2 + $0x78] sm:$0xff]
        %v1271 = vld [vmem:[#allocation2 + $0x80] sm:$0xff]
        %v1272 = vld [vmem:[#allocation2 + $0x88] sm:$0xff]
        %v1273 = vld [vmem:[#allocation2 + $0x90] sm:$0xff]
        %v1274 = vld [vmem:[#allocation2 + $0x98] sm:$0xff]
        %v1275 = vld [vmem:[#allocation2 + $0xa0] sm:$0xff]
        %v1276 = vld [vmem:[#allocation2 + $0xa8] sm:$0xff]
        %v1277 = vld [vmem:[#allocation2 + $0xb0] sm:$0xff]
        %v1278 = vld [vmem:[#allocation2 + $0xb8] sm:$0xff]
        %v1279 = vld [vmem:[#allocation2 + $0xc0] sm:$0xff]
        %v1280 = vld [vmem:[#allocation2 + $0xc8] sm:$0xff]
        %v1281 = vld [vmem:[#allocation2 + $0xd0] sm:$0xff]
        %v1282 = vld [vmem:[#allocation2 + $0xd8] sm:$0xff]
        %v1283 = vld [vmem:[#allocation2 + $0xe0] sm:$0xff]
        %v1284 = vld [vmem:[#allocation2 + $0xe8] sm:$0xff]
        %v1285 = vld [vmem:[#allocation2 + $0xf0] sm:$0xff]
        %v1286 = vld [vmem:[#allocation2 + $0xf8] sm:$0xff]
        %v1287 = vld [vmem:[#allocation2 + $0x100] sm:$0xff]
        %v1288 = vld [vmem:[#allocation2 + $0x108] sm:$0xff]
        %v1289 = vld [vmem:[#allocation2 + $0x110] sm:$0xff]
        %v1290 = vld [vmem:[#allocation2 + $0x118] sm:$0xff]
        %v1292 = vsel %vm387, %v1252, 0
        %v1295 = vsel %vm387, %v1254, 0
        %1297 = vmatprep.subr.mxu0 %v1256
        %1298 = vmatpush1.msra.mxu0 %v1255
        %1299 = vmatprep.subr.mxu0 %v1258
        %1300 = vmatpush1.msra.mxu0 %v1257
        %1301 = vmatprep.subr.mxu0 %v1260
        %1302 = vmatpush1.msra.mxu0 %v1259
        %1303 = vmatprep.subr.mxu0 %v1262
        %1304 = vmatpush1.msra.mxu0 %v1261
        %1305 = vmatprep.subr.mxu0 %v1264
        %1306 = vmatpush1.msra.mxu0 %v1263
        %1307 = vmatprep.subr.mxu0 %v1266
        %1308 = vmatpush1.msra.mxu0 %v1265
        %1309 = vmatprep.subr.mxu0 %v1268
        %1310 = vmatpush1.msra.mxu0 %v1267
        %1311 = vmatprep.subr.mxu0 %v1270
        %1312 = vmatpush1.msra.mxu0 %v1269
        %1313 = vmatprep.subr.mxu0 %v1272
        %1314 = vmatpush1.msra.mxu0 %v1271
        %1315 = vmatprep.subr.mxu0 %v1274
        %1316 = vmatpush1.msra.mxu0 %v1273
        %1317 = vmatprep.subr.mxu0 %v1276
        %1318 = vmatpush1.msra.mxu0 %v1275
        %1319 = vmatprep.subr.mxu0 %v1278
        %1320 = vmatpush1.msra.mxu0 %v1277
        %1321 = vmatprep.subr.mxu0 %v1280
        %1322 = vmatpush1.msra.mxu0 %v1279
        %1323 = vmatprep.subr.mxu0 %v1282
        %1324 = vmatpush1.msra.mxu0 %v1281
        %1325 = vmatprep.subr.mxu0 %v1284
        %1326 = vmatpush1.msra.mxu0 %v1283
        %1327 = vmatprep.subr.mxu0 %v1286
        %1328 = vmatpush1.msra.mxu0 %v1285
        %1329 = vmatprep.subr.mxu0 %v1288
        %1330 = vmatpush1.msra.mxu0 %v1287
        %1331 = vmatprep.subr.mxu0 %v1290
        %1332 = vmatpush1.msra.mxu0 %v1289
        %1333 = vmatprep.subr.mxu0 0.0
        %1334 = vmatpush1.msra.mxu0 0.0
        %1335 = vmatprep.subr.mxu0 0.0
        %1336 = vmatpush1.msra.mxu0 0.0
        %1337 = vmatprep.subr.mxu0 0.0
        %1338 = vmatpush1.msra.mxu0 0.0
        %1339 = vmatprep.subr.mxu0 0.0
        %1340 = vmatpush1.msra.mxu0 0.0
        %1341 = vmatprep.subr.mxu0 0.0
        %1342 = vmatpush1.msra.mxu0 0.0
        %1343 = vmatprep.subr.mxu0 0.0
        %1344 = vmatpush1.msra.mxu0 0.0
        %1345 = vmatprep.subr.mxu0 0.0
        %1346 = vmatpush1.msra.mxu0 0.0
        %1347 = vmatprep.subr.mxu0 0.0
        %1348 = vmatpush1.msra.mxu0 0.0
        %1349 = vmatprep.subr.mxu0 0.0
        %1350 = vmatpush1.msra.mxu0 0.0
        %1351 = vmatprep.subr.mxu0 0.0
        %1352 = vmatpush1.msra.mxu0 0.0
        %1353 = vmatprep.subr.mxu0 0.0
        %1354 = vmatpush1.msra.mxu0 0.0
        %1355 = vmatprep.subr.mxu0 0.0
        %1356 = vmatpush1.msra.mxu0 0.0
        %1357 = vmatprep.subr.mxu0 0.0
        %1358 = vmatpush1.msra.mxu0 0.0
        %1359 = vmatprep.subr.mxu0 0.0
        %1360 = vmatpush1.msra.mxu0 0.0
        %1361 = vmatprep.mubr.f32.mxu0 %v1292
        %1362 = vmatmul.mubr.f32.gmra.mrb[0].mxu0 %v1251
        %v1363 = vpop.f32.mrb[0].mxu0
        %v1364 = vadd.f32 %v367, %v1363
        %v1365 = vpop.f32.mrb[0].mxu0
        %v1366 = vadd.f32 %v368, %v1365
        %1367 = vmatprep.mubr.f32.mxu0 %v1295
        %1368 = vmatmul.mubr.f32.gmra.mrb[0].mxu0 %v1253
        %v1369 = vpop.f32.mrb[0].mxu0
        %v1370 = vadd.f32 %v369, %v1369
        %v1371 = vpop.f32.mrb[0].mxu0
        %v1372 = vadd.f32 %v370, %v1371
        %1373 = vdwg.mxu0
        %1374 = vst [vmem:[%s298] sm:$0xff] %v1364
        %1375 = vst [vmem:[%s298 + $0x8] sm:$0xff] %v1366
        %1376 = vst [vmem:[%s298 + $0x10] sm:$0xff] %v1370
        %1377 = vst [vmem:[%s298 + $0x18] sm:$0xff] %v1372
        %s1378 = sand.u32 %s142, 1
        %s1379 = scalar_lea.sflag [#allocation5], %s1378
        %s1380 = sand.u32 %s142, 1
        %s1381 = smul.addr %s1380, 32
        %s1382 = scalar_lea.vmem [#allocation12], %s1381
        // Predicated region
        $region61: #{tpu_custom_call.1} parent=39 // pred_check
          %p1383 = pneg %p152
        $region62: #{tpu_custom_call.1} parent=39 // pred_check_branch
          %1385 = sbr.rel (%p1383) target = $region64
        $region63: #{tpu_custom_call.1} parent=39 // pred_region
          %s1387 = ssub.s32 512, 512
          %1388 = vsyncadd %s1379, %s1387
          %s1389 = smul.addr %s24, 4
          %s1390 = smul.addr %s1389, 128
          %s1391 = scalar_lea.hbm %s5, %s1390
          %s1392 = sshll.u32 %s1382, 4
          %s1393 = int_to_ptr.vmem [resolvable:$true] %s1392
          %1398 = dma.vmem_to_hbm [thread:$0]  %s1393, 512, %s1391, %s1379, 256, 256, 16
        $region64: #{tpu_custom_call.1} parent=39 // pred_fallthru
          _
      $region40: #{tpu_custom_call.1} parent=5 // pred_fallthru
        _
      %p1399 = scmp.le.s32.totalorder 2, %s19
      // Predicated region
      $region65: #{tpu_custom_call.1} parent=5 // pred_check
        %p1400 = pneg %p1399
      $region66: #{tpu_custom_call.1} parent=5 // pred_check_branch
        %1402 = sbr.rel (%p1400) target = $region68
      $region67: #{tpu_custom_call.1} parent=5 // pred_region
        %s1403 = ssub.s32 %s19, 2
        // Predicated region
        $region69: #{tpu_custom_call.1} parent=67 // pred_check
          %p1404 = pneg %p158
        $region70: #{tpu_custom_call.1} parent=67 // pred_check_branch
          %1406 = sbr.rel (%p1404) target = $region72
        $region71: #{tpu_custom_call.1} parent=67 // pred_region
          %s1407 = sand.u32 %s143, 1
          %s1408 = scalar_lea.sflag [#allocation5], %s1407
          %s1409 = sand.u32 %s143, 1
          %s1410 = smul.addr %s1409, 32
          %s1411 = scalar_lea.vmem [#allocation12], %s1410
          %1412 = dma.done %s1408, 512
        $region72: #{tpu_custom_call.1} parent=67 // pred_fallthru
          _
      $region68: #{tpu_custom_call.1} parent=5 // pred_fallthru
        _
    $region6: #{tpu_custom_call.1} parent=1 // loop_footer
      %s23 = sadd.s32 1, %s19
    $region7: #{tpu_custom_call.1} parent=1 // loop_footer_branch
      %18 = sbr.rel target = $region3
    $region8: #{tpu_custom_call.1} parent=1 // loop_exit
      _
    %1413 = vsyncpa [#allocation4], 1
    %s1414 = scalar_lea.sflag [#allocation4], 1
    %1415 = vsyncpa %s1414, 1
    %1416 = vsyncpa [#allocation7], 1
    %1417 = vsyncpa [#allocation10], 1
    %1418 = vsyncpa [#allocation5], 1
    %s1419 = scalar_lea.sflag [#allocation5], 1
    %1420 = vsyncpa %s1419, 1

</llo_original>
